<compile_context>
chip_gen: v7x
topology: tpu7x:2x2x1
jax: 0.10.0
libtpu: 0.0.40
codegen_flags: <defaults>
</compile_context>

<pallas_src>
import functools
import math

import jax
import jax.numpy as jnp
from jax.experimental import pallas as pl
from jax.experimental.pallas import tpu as pltpu

_LANE = 128  # TPU lane width (same on v5e / v6e / v7x)


def _round_up(x, m):
    return (x + m - 1) // m * m


def _vmem_capacity_bytes():
    """Per-core VMEM capacity (v5e/v6e: 128 MiB, v7x: 64 MiB), with fallback."""
    try:
        info = pltpu.get_tpu_info()
        for name in ("vmem_capacity_bytes", "vmem_size_bytes", "vmem_bytes"):
            cap = getattr(info, name, None)
            if cap:
                return int(cap)
    except Exception:
        pass
    return 64 * 2**20  # conservative: assume v7x


# ---------------------------------------------------------------------------
# Pallas kernel: kxk conv as im2col-in-VMEM + ONE K=(k*k*Cin) MXU matmul,
# fused with folded-BN affine, optional residual add or fused 1x1 projection
# shortcut (+ its BN), and optional ReLU.
# ---------------------------------------------------------------------------
def _fused_conv_bn_kernel(*refs, k, stride, th, wo, cinp, relu, res_mode):
    if res_mode == "none":
        xp_ref, w_ref, scale_ref, bias_ref, o_ref, col_ref = refs
    elif res_mode == "add":
        xp_ref, w_ref, scale_ref, bias_ref, res_ref, o_ref, col_ref = refs
    else:  # "proj": fused 1x1 strided shortcut conv + its BN affine
        (xp_ref, w_ref, scale_ref, bias_ref,
         xs_ref, ws_ref, ssc_ref, bsc_ref, o_ref, col_ref) = refs

    j = pl.program_id(1)
    row0 = j * th                                # first output row of this tile

    # Build the (th*wo, k*k*cinp) im2col tile in the VMEM scratch: each conv
    # tap is a contiguous static-offset slice of the phase-split slab.
    for kh in range(k):                          # static, fully unrolled
        for kw in range(k):
            phase = (kh % stride) * stride + (kw % stride)
            dh, dw = kh // stride, kw // stride
            patch = xp_ref[0, phase, pl.ds(row0 + dh, th), pl.ds(dw, wo), :]
            tap = kh * k + kw
            col_ref[:, tap * cinp:(tap + 1) * cinp] = patch.reshape(th * wo, cinp)

    # Single big-K matmul (K = k*k*cinp), f32 MXU accumulation.
    acc = jnp.dot(col_ref[...], w_ref[...], preferred_element_type=jnp.float32)

    y = acc * scale_ref[...] + bias_ref[...]     # folded BN affine (f32)
    if res_mode == "add":
        y = y + res_ref[0].astype(jnp.float32)
    elif res_mode == "proj":
        sc = jnp.dot(xs_ref[0], ws_ref[...], preferred_element_type=jnp.float32)
        y = y + sc * ssc_ref[...] + bsc_ref[...]
    if relu:
        y = jnp.maximum(y, 0.0)
    o_ref[0] = y.astype(o_ref.dtype)


# ---------------------------------------------------------------------------
# pallas_call wrapper
# ---------------------------------------------------------------------------
def _pick_row_tile(n, ho, wo, target_elems):
    """Largest divisor th of ho such that the output tile is sublane-aligned
    ((th*wo) % 8 == 0 or full), fits the per-tile element budget, and leaves
    >= 4 grid steps when possible (megacore / pipeline overlap on v7x)."""
    divs = [d for d in range(1, ho + 1) if ho % d == 0]
    aligned = [d for d in divs if (d * wo) % 8 == 0 or d == ho] or [ho]
    cands = [d for d in aligned if d * wo <= target_elems] or aligned
    good = [d for d in cands if n * (ho // d) >= 4]
    return max(good) if good else max(cands)


def conv_bn_pallas(xph, w_cat, scale, bias, *, k, ho, wo, stride, relu,
                   residual=None, proj=None,
                   compute_dtype=jnp.float32, out_dtype=jnp.float32):
    """xph:   (N, stride*stride, Hs, Ws, Cinp) phase-split zero-padded input
    w_cat:  (k*k*Cinp, Coutp) tap-concatenated weights (channels lane-padded)
    scale/bias: (1, Coutp) folded-BN affine (zero in padded channels)
    residual: (N, Ho*Wo, Coutp) added before ReLU (identity shortcut)
    proj: (xs (N,Ho*Wo,Cinp_sc), ws (Cinp_sc,Coutp), ssc, bsc) 1x1 shortcut
    Returns (N, Ho*Wo, Coutp)."""
    n, p, hs, wsl, cinp = xph.shape
    kc, coutp = w_cat.shape
    ktotal = k * k
    assert p == stride * stride and kc == ktotal * cinp
    assert cinp % _LANE == 0 and coutp % _LANE == 0

    itemsize = jnp.dtype(compute_dtype).itemsize
    cap = _vmem_capacity_bytes()

    # Row tile: budget the im2col scratch at ~cap/12 so bigger chips run bigger
    # tiles (fewer ~0.35us grid-step overheads) while v7x's 64 MiB stays safe.
    col_row_bytes = ktotal * cinp * itemsize
    target_elems = max(wo, (cap // 12) // max(col_row_bytes, 1))
    th = _pick_row_tile(n, ho, wo, target_elems)
    grid = (n, ho // th)

    xph = xph.astype(compute_dtype)
    w_cat = w_cat.astype(compute_dtype)
    scale = scale.astype(jnp.float32).reshape(1, coutp)
    bias = bias.astype(jnp.float32).reshape(1, coutp)

    in_specs = [
        # Whole phase-split image: constant block index along the row-tile axis
        # -> fetched once per image, halo rows sliced in-kernel.
        pl.BlockSpec((1, p, hs, wsl, cinp), lambda ni, ji: (ni, 0, 0, 0, 0)),
        # Tap-concatenated weights / BN affine: constant index, VMEM-resident.
        pl.BlockSpec((ktotal * cinp, coutp), lambda ni, ji: (0, 0)),
        pl.BlockSpec((1, coutp), lambda ni, ji: (0, 0)),
        pl.BlockSpec((1, coutp), lambda ni, ji: (0, 0)),
    ]
    args = [xph, w_cat, scale, bias]

    if proj is not None:
        xs, wsc, ssc, bsc = proj
        cinp_s = xs.shape[-1]
        assert cinp_s % _LANE == 0
        in_specs += [
            pl.BlockSpec((1, th * wo, cinp_s), lambda ni, ji: (ni, ji, 0)),
            pl.BlockSpec((cinp_s, coutp), lambda ni, ji: (0, 0)),
            pl.BlockSpec((1, coutp), lambda ni, ji: (0, 0)),
            pl.BlockSpec((1, coutp), lambda ni, ji: (0, 0)),
        ]
        args += [xs.astype(compute_dtype), wsc.astype(compute_dtype),
                 ssc.astype(jnp.float32).reshape(1, coutp),
                 bsc.astype(jnp.float32).reshape(1, coutp)]
        res_mode = "proj"
    elif residual is not None:
        assert residual.shape[-1] == coutp
        in_specs.append(pl.BlockSpec((1, th * wo, coutp),
                                     lambda ni, ji: (ni, ji, 0)))
        # Residual travels in compute_dtype (bf16-friendly), upcast in-kernel.
        args.append(residual.astype(compute_dtype))
        res_mode = "add"
    else:
        res_mode = "none"

    kernel = functools.partial(_fused_conv_bn_kernel, k=k, stride=stride,
                               th=th, wo=wo, cinp=cinp, relu=relu,
                               res_mode=res_mode)

    def _nbytes(shape, dt):
        return math.prod(shape) * jnp.dtype(dt).itemsize

    est = (2 * _nbytes((1, p, hs, wsl, cinp), compute_dtype)      # slab (x2 buf)
           + _nbytes((ktotal * cinp, coutp), compute_dtype)        # weights
           + 4 * _nbytes((1, coutp), jnp.float32)                  # scale/bias
           + 2 * _nbytes((1, th * wo, coutp), out_dtype)           # out (x2 buf)
           + _nbytes((th * wo, ktotal * cinp), compute_dtype))     # col scratch
    if res_mode == "proj":
        est += (2 * _nbytes((1, th * wo, args[4].shape[-1]), compute_dtype)
                + _nbytes(args[5].shape, compute_dtype)
                + 4 * _nbytes((1, coutp), jnp.float32))
    elif res_mode == "add":
        est += 2 * _nbytes((1, th * wo, coutp), compute_dtype)
    vmem_limit = int(min(int(cap * 0.85), max(32 * 2**20, 2 * est)))

    return pl.pallas_call(
        kernel,
        out_shape=jax.ShapeDtypeStruct((n, ho * wo, coutp), out_dtype),
        grid=grid,
        in_specs=in_specs,
        out_specs=pl.BlockSpec((1, th * wo, coutp), lambda ni, ji: (ni, ji, 0)),
        scratch_shapes=[pltpu.VMEM((th * wo, ktotal * cinp), compute_dtype)],
        compiler_params=pltpu.CompilerParams(
            dimension_semantics=("parallel", "parallel"),
            vmem_limit_bytes=vmem_limit),
    )(*args)


# ---------------------------------------------------------------------------
# JAX glue: phase-split padding, BN folding, weight layout, parameter setup
# ---------------------------------------------------------------------------
def phase_split_pad(x_nhwc, ksize, stride, padding):
    """Zero-pad and split into stride*stride phase slabs so each conv tap is a
    contiguous (Ho, Wo) slice at a static offset of one slab (1x data vs the
    9x HBM-materialised im2col)."""
    n, h, w, c = x_nhwc.shape
    ho = (h + 2 * padding - ksize) // stride + 1
    wo = (w + 2 * padding - ksize) // stride + 1
    hs = ho + (ksize - 1) // stride
    ws = wo + (ksize - 1) // stride
    pad_h = stride * hs - h - padding
    pad_w = stride * ws - w - padding
    assert pad_h >= 0 and pad_w >= 0
    xp = jnp.pad(x_nhwc, ((0, 0), (padding, pad_h), (padding, pad_w), (0, 0)))
    xr = xp.reshape(n, hs, stride, ws, stride, c)
    xph = jnp.transpose(xr, (0, 2, 4, 1, 3, 5)).reshape(
        n, stride * stride, hs, ws, c)
    return xph, ho, wo


def bn_affine(gamma, beta, mean, var, eps=1e-5, cpad=None):
    scale = gamma / jnp.sqrt(var + eps)
    bias = beta - mean * scale
    if cpad is not None:
        scale = jnp.pad(scale, (0, cpad - scale.shape[0]))
        bias = jnp.pad(bias, (0, cpad - bias.shape[0]))
    return scale.reshape(1, -1), bias.reshape(1, -1)


def conv_w_to_taps(w_oihw, cinp, coutp):
    """(Cout, Cin, kh, kw) torch layout -> lane-padded, tap-concatenated
    (kh*kw*Cinp, Coutp) so the conv is a single K=kh*kw*Cinp matmul."""
    co, ci, kh, kw = w_oihw.shape
    w = jnp.transpose(w_oihw, (2, 3, 1, 0)).reshape(kh * kw, ci, co)
    w = jnp.pad(w, ((0, 0), (0, cinp - ci), (0, coutp - co)))
    return w.reshape(kh * kw * cinp, coutp)


def init_params(key, in_planes, planes, stride):
    keys = jax.random.split(key, 6)

    def conv_w(k, co, ci, ksz):
        fan_in = ci * ksz * ksz
        bound = 1.0 / (fan_in ** 0.5)
        return jax.random.uniform(k, (co, ci, ksz, ksz), jnp.float32, -bound, bound)

    def bn_p(k):
        kg, kb, km, kv = jax.random.split(k, 4)
        gamma = jax.random.uniform(kg, (planes,), jnp.float32, 0.5, 1.5)
        beta = jax.random.uniform(kb, (planes,), jnp.float32, -0.1, 0.1)
        mean = 0.1 * jax.random.normal(km, (planes,), jnp.float32)
        var = jax.random.uniform(kv, (planes,), jnp.float32, 0.5, 1.5)
        return gamma, beta, mean, var

    params = {
        "w1": conv_w(keys[0], planes, in_planes, 3),
        "bn1": bn_p(keys[1]),
        "w2": conv_w(keys[2], planes, planes, 3),
        "bn2": bn_p(keys[3]),
        "ws": None,
        "bns": None,
    }
    if stride != 1 or in_planes != planes:
        params["ws"] = conv_w(keys[4], planes, in_planes, 1)
        params["bns"] = bn_p(keys[5])
    return params


# ---------------------------------------------------------------------------
# BasicBlock forward using the Pallas kernels
# ---------------------------------------------------------------------------
def basic_block_forward(x_nchw, params, stride, compute_dtype=jnp.float32):
    x = jnp.transpose(x_nchw, (0, 2, 3, 1))                 # NCHW -> NHWC
    n, h, w, cin = x.shape
    planes = params["w1"].shape[0]
    cinp = _round_up(cin, _LANE)                             # lane-pad channels
    coutp = _round_up(planes, _LANE)

    xpad = jnp.pad(x, ((0, 0), (0, 0), (0, 0), (0, cinp - cin)))

    # conv1 (3x3, stride) + bn1 + relu -- fused Pallas kernel.
    xph, ho, wo = phase_split_pad(xpad, 3, stride, 1)
    w1 = conv_w_to_taps(params["w1"], cinp, coutp)
    s1, b1 = bn_affine(*params["bn1"], cpad=coutp)
    y1 = conv_bn_pallas(xph, w1, s1, b1, k=3, ho=ho, wo=wo, stride=stride,
                        relu=True, compute_dtype=compute_dtype,
                        out_dtype=compute_dtype)

    # conv2 (3x3, stride 1) + bn2 + shortcut + relu -- single fused kernel.
    # TODO(synk): have conv1's out_spec write straight into this zero-padded
    #             layout (offset interior) to remove the extra pad pass.
    y1ph, _, _ = phase_split_pad(y1.reshape(n, ho, wo, coutp), 3, 1, 1)
    w2 = conv_w_to_taps(params["w2"], coutp, coutp)
    s2, b2 = bn_affine(*params["bn2"], cpad=coutp)

    if params["ws"] is not None:
        # Strided 1x1 projection shortcut fused into the tail kernel.
        xs = xpad[:, :stride * (ho - 1) + 1:stride,
                     :stride * (wo - 1) + 1:stride, :].reshape(n, ho * wo, cinp)
        wsc = jnp.transpose(params["ws"][:, :, 0, 0], (1, 0))   # (Cin, Cout)
        wsc = jnp.pad(wsc, ((0, cinp - cin), (0, coutp - planes)))
        ssc, bsc = bn_affine(*params["bns"], cpad=coutp)
        out = conv_bn_pallas(y1ph, w2, s2, b2, k=3, ho=ho, wo=wo, stride=1,
                             relu=True, proj=(xs, wsc, ssc, bsc),
                             compute_dtype=compute_dtype)
    else:
        out = conv_bn_pallas(y1ph, w2, s2, b2, k=3, ho=ho, wo=wo, stride=1,
                             relu=True, residual=xpad.reshape(n, h * w, cinp),
                             compute_dtype=compute_dtype)

    out = out.reshape(n, ho, wo, coutp)[..., :planes]        # drop lane padding
    return jnp.transpose(out, (0, 3, 1, 2)).astype(jnp.float32)   # NCHW


# ---------------------------------------------------------------------------
# Pure-JAX reference (for correctness check)
# ---------------------------------------------------------------------------
def _conv_ref(x_nhwc, w_oihw, stride, padding):
    return jax.lax.conv_general_dilated(
        x_nhwc, jnp.transpose(w_oihw, (2, 3, 1, 0)),
        window_strides=(stride, stride),
        padding=[(padding, padding), (padding, padding)],
        dimension_numbers=("NHWC", "HWIO", "NHWC"))


def basic_block_ref(x_nchw, params, stride):
    x = jnp.transpose(x_nchw, (0, 2, 3, 1))
    s1, b1 = bn_affine(*params["bn1"])
    s2, b2 = bn_affine(*params["bn2"])
    out = _conv_ref(x, params["w1"], stride, 1)
    out = jax.nn.relu(out * s1.reshape(1, 1, 1, -1) + b1.reshape(1, 1, 1, -1))
    out = _conv_ref(out, params["w2"], 1, 1)
    out = out * s2.reshape(1, 1, 1, -1) + b2.reshape(1, 1, 1, -1)
    if params["ws"] is not None:
        ss, bs = bn_affine(*params["bns"])
        sc = _conv_ref(x, params["ws"], stride, 0)
        sc = sc * ss.reshape(1, 1, 1, -1) + bs.reshape(1, 1, 1, -1)
    else:
        sc = x
    out = jax.nn.relu(out + sc)
    return jnp.transpose(out, (0, 3, 1, 2))


if __name__ == "__main__":
    key = jax.random.PRNGKey(0)
    fwd = jax.jit(basic_block_forward, static_argnums=(2, 3))

    # Config 1: projection (1x1 conv + BN) shortcut path, stride 2, f32.
    k_x, k_p = jax.random.split(jax.random.fold_in(key, 0))
    x = jax.random.normal(k_x, (2, 4, 16, 16), jnp.float32)
    params = init_params(k_p, 4, 8, 2)
    out = jax.block_until_ready(fwd(x, params, 2, jnp.float32))
    ref = basic_block_ref(x, params, 2)
    assert out.shape == ref.shape, (out.shape, ref.shape)
    err = float(jnp.max(jnp.abs(out - ref)))
    if err > 5e-4:
        raise AssertionError(f"projection-path mismatch vs reference: {err:e}")

    # Config 2: identity shortcut path, stride 1, f32.
    k_x2, k_p2 = jax.random.split(jax.random.fold_in(key, 1))
    x2 = jax.random.normal(k_x2, (2, 8, 8, 8), jnp.float32)
    params2 = init_params(k_p2, 8, 8, 1)
    out2 = jax.block_until_ready(fwd(x2, params2, 1, jnp.float32))
    ref2 = basic_block_ref(x2, params2, 1)
    assert out2.shape == ref2.shape, (out2.shape, ref2.shape)
    err2 = float(jnp.max(jnp.abs(out2 - ref2)))
    if err2 > 5e-4:
        raise AssertionError(f"identity-path mismatch vs reference: {err2:e}")

    # Config 3: bf16 compute path (recommended default on v6e/v7x), loose tol.
    out3 = jax.block_until_ready(fwd(x, params, 2, jnp.bfloat16))
    assert out3.shape == ref.shape, (out3.shape, ref.shape)
    assert bool(jnp.all(jnp.isfinite(out3)))
    err3 = float(jnp.max(jnp.abs(out3 - ref)))
    if err3 > 0.25:
        raise AssertionError(f"bf16-path mismatch vs reference: {err3:e}")

    print("KERNEL_OK")
</pallas_src>

<mosaic_0001>
module attributes {stable_mosaic.version = 11 : i64} {
  func.func @_fused_conv_bn_kernel(%arg0: i32, %arg1: i32, %arg2: memref<1x4x9x9x128xf32, #tpu.memory_space<vmem>>, %arg3: memref<1152x128xf32, #tpu.memory_space<vmem>>, %arg4: memref<1x128xf32, #tpu.memory_space<vmem>>, %arg5: memref<1x128xf32, #tpu.memory_space<vmem>>, %arg6: memref<1x32x128xf32, #tpu.memory_space<vmem>>, %arg7: memref<32x1152xf32, #tpu.memory_space<vmem>>) attributes {dimension_semantics = [#tpu.dimension_semantics<parallel>, #tpu.dimension_semantics<parallel>], iteration_bounds = array<i64: 2, 2>, scalar_prefetch = 0 : i64, scratch_operands = 1 : i64, tpu.core_type = #tpu.core_type<tc>, window_params = [{transform_indices = @transform_0, window_bounds = array<i64: 1, 4, 9, 9, 128>}, {pipeline_mode = #tpu.pipeline_mode<synchronous>, transform_indices = @transform_1, window_bounds = array<i64: 1152, 128>}, {pipeline_mode = #tpu.pipeline_mode<synchronous>, transform_indices = @transform_2, window_bounds = array<i64: 1, 128>}, {pipeline_mode = #tpu.pipeline_mode<synchronous>, transform_indices = @transform_3, window_bounds = array<i64: 1, 128>}, {transform_indices = @transform_4, window_bounds = array<i64: 1, 32, 128>}]} {
    %c4_i32 = arith.constant 4 : i32
    %0 = arith.muli %arg1, %c4_i32 : i32
    %c0_i32 = arith.constant 0 : i32
    %1 = arith.addi %0, %c0_i32 : i32
    %c0 = arith.constant 0 : index
    %c0_0 = arith.constant 0 : index
    %2 = arith.index_cast %1 : i32 to index
    %c0_1 = arith.constant 0 : index
    %c0_2 = arith.constant 0 : index
    %3 = vector.load %arg2[%c0, %c0_0, %2, %c0_1, %c0_2] : memref<1x4x9x9x128xf32, #tpu.memory_space<vmem>>, vector<1x1x4x8x128xf32>
    %4 = vector.shape_cast %3 : vector<1x1x4x8x128xf32> to vector<4x8x128xf32>
    %5 = vector.shape_cast %4 : vector<4x8x128xf32> to vector<32x128xf32>
    %c0_3 = arith.constant 0 : index
    %c0_4 = arith.constant 0 : index
    %6 = vector.load %arg7[%c0_3, %c0_4] : memref<32x1152xf32, #tpu.memory_space<vmem>>, vector<32x128xf32>
    tpu.vector_store %arg7[%c0_3, %c0_4], %5 {strides = array<i32>} : memref<32x1152xf32, #tpu.memory_space<vmem>>, vector<32x128xf32>,
    %c0_i32_5 = arith.constant 0 : i32
    %7 = arith.addi %0, %c0_i32_5 : i32
    %c0_6 = arith.constant 0 : index
    %c1 = arith.constant 1 : index
    %8 = arith.index_cast %7 : i32 to index
    %c0_7 = arith.constant 0 : index
    %c0_8 = arith.constant 0 : index
    %9 = vector.load %arg2[%c0_6, %c1, %8, %c0_7, %c0_8] : memref<1x4x9x9x128xf32, #tpu.memory_space<vmem>>, vector<1x1x4x8x128xf32>
    %10 = vector.shape_cast %9 : vector<1x1x4x8x128xf32> to vector<4x8x128xf32>
    %11 = vector.shape_cast %10 : vector<4x8x128xf32> to vector<32x128xf32>
    %c0_9 = arith.constant 0 : index
    %c128 = arith.constant 128 : index
    %12 = vector.load %arg7[%c0_9, %c128] : memref<32x1152xf32, #tpu.memory_space<vmem>>, vector<32x128xf32>
    tpu.vector_store %arg7[%c0_9, %c128], %11 {strides = array<i32>} : memref<32x1152xf32, #tpu.memory_space<vmem>>, vector<32x128xf32>,
    %c0_i32_10 = arith.constant 0 : i32
    %13 = arith.addi %0, %c0_i32_10 : i32
    %c0_11 = arith.constant 0 : index
    %c0_12 = arith.constant 0 : index
    %14 = arith.index_cast %13 : i32 to index
    %c1_13 = arith.constant 1 : index
    %c0_14 = arith.constant 0 : index
    %15 = vector.load %arg2[%c0_11, %c0_12, %14, %c1_13, %c0_14] : memref<1x4x9x9x128xf32, #tpu.memory_space<vmem>>, vector<1x1x4x8x128xf32>
    %16 = vector.shape_cast %15 : vector<1x1x4x8x128xf32> to vector<4x8x128xf32>
    %17 = vector.shape_cast %16 : vector<4x8x128xf32> to vector<32x128xf32>
    %c0_15 = arith.constant 0 : index
    %c256 = arith.constant 256 : index
    %18 = vector.load %arg7[%c0_15, %c256] : memref<32x1152xf32, #tpu.memory_space<vmem>>, vector<32x128xf32>
    tpu.vector_store %arg7[%c0_15, %c256], %17 {strides = array<i32>} : memref<32x1152xf32, #tpu.memory_space<vmem>>, vector<32x128xf32>,
    %c0_i32_16 = arith.constant 0 : i32
    %19 = arith.addi %0, %c0_i32_16 : i32
    %c0_17 = arith.constant 0 : index
    %c2 = arith.constant 2 : index
    %20 = arith.index_cast %19 : i32 to index
    %c0_18 = arith.constant 0 : index
    %c0_19 = arith.constant 0 : index
    %21 = vector.load %arg2[%c0_17, %c2, %20, %c0_18, %c0_19] : memref<1x4x9x9x128xf32, #tpu.memory_space<vmem>>, vector<1x1x4x8x128xf32>
    %22 = vector.shape_cast %21 : vector<1x1x4x8x128xf32> to vector<4x8x128xf32>
    %23 = vector.shape_cast %22 : vector<4x8x128xf32> to vector<32x128xf32>
    %c0_20 = arith.constant 0 : index
    %c384 = arith.constant 384 : index
    %24 = vector.load %arg7[%c0_20, %c384] : memref<32x1152xf32, #tpu.memory_space<vmem>>, vector<32x128xf32>
    tpu.vector_store %arg7[%c0_20, %c384], %23 {strides = array<i32>} : memref<32x1152xf32, #tpu.memory_space<vmem>>, vector<32x128xf32>,
    %c0_i32_21 = arith.constant 0 : i32
    %25 = arith.addi %0, %c0_i32_21 : i32
    %c0_22 = arith.constant 0 : index
    %c3 = arith.constant 3 : index
    %26 = arith.index_cast %25 : i32 to index
    %c0_23 = arith.constant 0 : index
    %c0_24 = arith.constant 0 : index
    %27 = vector.load %arg2[%c0_22, %c3, %26, %c0_23, %c0_24] : memref<1x4x9x9x128xf32, #tpu.memory_space<vmem>>, vector<1x1x4x8x128xf32>
    %28 = vector.shape_cast %27 : vector<1x1x4x8x128xf32> to vector<4x8x128xf32>
    %29 = vector.shape_cast %28 : vector<4x8x128xf32> to vector<32x128xf32>
    %c0_25 = arith.constant 0 : index
    %c512 = arith.constant 512 : index
    %30 = vector.load %arg7[%c0_25, %c512] : memref<32x1152xf32, #tpu.memory_space<vmem>>, vector<32x128xf32>
    tpu.vector_store %arg7[%c0_25, %c512], %29 {strides = array<i32>} : memref<32x1152xf32, #tpu.memory_space<vmem>>, vector<32x128xf32>,
    %c0_i32_26 = arith.constant 0 : i32
    %31 = arith.addi %0, %c0_i32_26 : i32
    %c0_27 = arith.constant 0 : index
    %c2_28 = arith.constant 2 : index
    %32 = arith.index_cast %31 : i32 to index
    %c1_29 = arith.constant 1 : index
    %c0_30 = arith.constant 0 : index
    %33 = vector.load %arg2[%c0_27, %c2_28, %32, %c1_29, %c0_30] : memref<1x4x9x9x128xf32, #tpu.memory_space<vmem>>, vector<1x1x4x8x128xf32>
    %34 = vector.shape_cast %33 : vector<1x1x4x8x128xf32> to vector<4x8x128xf32>
    %35 = vector.shape_cast %34 : vector<4x8x128xf32> to vector<32x128xf32>
    %c0_31 = arith.constant 0 : index
    %c640 = arith.constant 640 : index
    %36 = vector.load %arg7[%c0_31, %c640] : memref<32x1152xf32, #tpu.memory_space<vmem>>, vector<32x128xf32>
    tpu.vector_store %arg7[%c0_31, %c640], %35 {strides = array<i32>} : memref<32x1152xf32, #tpu.memory_space<vmem>>, vector<32x128xf32>,
    %c1_i32 = arith.constant 1 : i32
    %37 = arith.addi %0, %c1_i32 : i32
    %c0_32 = arith.constant 0 : index
    %c0_33 = arith.constant 0 : index
    %38 = arith.index_cast %37 : i32 to index
    %c0_34 = arith.constant 0 : index
    %c0_35 = arith.constant 0 : index
    %39 = vector.load %arg2[%c0_32, %c0_33, %38, %c0_34, %c0_35] : memref<1x4x9x9x128xf32, #tpu.memory_space<vmem>>, vector<1x1x4x8x128xf32>
    %40 = vector.shape_cast %39 : vector<1x1x4x8x128xf32> to vector<4x8x128xf32>
    %41 = vector.shape_cast %40 : vector<4x8x128xf32> to vector<32x128xf32>
    %c0_36 = arith.constant 0 : index
    %c768 = arith.constant 768 : index
    %42 = vector.load %arg7[%c0_36, %c768] : memref<32x1152xf32, #tpu.memory_space<vmem>>, vector<32x128xf32>
    tpu.vector_store %arg7[%c0_36, %c768], %41 {strides = array<i32>} : memref<32x1152xf32, #tpu.memory_space<vmem>>, vector<32x128xf32>,
    %c1_i32_37 = arith.constant 1 : i32
    %43 = arith.addi %0, %c1_i32_37 : i32
    %c0_38 = arith.constant 0 : index
    %c1_39 = arith.constant 1 : index
    %44 = arith.index_cast %43 : i32 to index
    %c0_40 = arith.constant 0 : index
    %c0_41 = arith.constant 0 : index
    %45 = vector.load %arg2[%c0_38, %c1_39, %44, %c0_40, %c0_41] : memref<1x4x9x9x128xf32, #tpu.memory_space<vmem>>, vector<1x1x4x8x128xf32>
    %46 = vector.shape_cast %45 : vector<1x1x4x8x128xf32> to vector<4x8x128xf32>
    %47 = vector.shape_cast %46 : vector<4x8x128xf32> to vector<32x128xf32>
    %c0_42 = arith.constant 0 : index
    %c896 = arith.constant 896 : index
    %48 = vector.load %arg7[%c0_42, %c896] : memref<32x1152xf32, #tpu.memory_space<vmem>>, vector<32x128xf32>
    tpu.vector_store %arg7[%c0_42, %c896], %47 {strides = array<i32>} : memref<32x1152xf32, #tpu.memory_space<vmem>>, vector<32x128xf32>,
    %c1_i32_43 = arith.constant 1 : i32
    %49 = arith.addi %0, %c1_i32_43 : i32
    %c0_44 = arith.constant 0 : index
    %c0_45 = arith.constant 0 : index
    %50 = arith.index_cast %49 : i32 to index
    %c1_46 = arith.constant 1 : index
    %c0_47 = arith.constant 0 : index
    %51 = vector.load %arg2[%c0_44, %c0_45, %50, %c1_46, %c0_47] : memref<1x4x9x9x128xf32, #tpu.memory_space<vmem>>, vector<1x1x4x8x128xf32>
    %52 = vector.shape_cast %51 : vector<1x1x4x8x128xf32> to vector<4x8x128xf32>
    %53 = vector.shape_cast %52 : vector<4x8x128xf32> to vector<32x128xf32>
    %c0_48 = arith.constant 0 : index
    %c1024 = arith.constant 1024 : index
    %54 = vector.load %arg7[%c0_48, %c1024] : memref<32x1152xf32, #tpu.memory_space<vmem>>, vector<32x128xf32>
    tpu.vector_store %arg7[%c0_48, %c1024], %53 {strides = array<i32>} : memref<32x1152xf32, #tpu.memory_space<vmem>>, vector<32x128xf32>,
    %c0_49 = arith.constant 0 : index
    %c0_50 = arith.constant 0 : index
    %55 = vector.load %arg7[%c0_49, %c0_50] : memref<32x1152xf32, #tpu.memory_space<vmem>>, vector<32x1152xf32>
    %c0_51 = arith.constant 0 : index
    %c0_52 = arith.constant 0 : index
    %56 = vector.load %arg3[%c0_51, %c0_52] : memref<1152x128xf32, #tpu.memory_space<vmem>>, vector<1152x128xf32>
    %cst = arith.constant dense<0.000000e+00> : vector<32x128xf32>
    %57 = tpu.matmul %55, %56, %cst {dimension_numbers = #tpu.dot_dimension_numbers<[1], [0], [0], [1], [0, 0, 1, 1], [], []>} : vector<32x1152xf32>, vector<1152x128xf32>, vector<32x128xf32> -> vector<32x128xf32>
    %c0_53 = arith.constant 0 : index
    %c0_54 = arith.constant 0 : index
    %58 = vector.load %arg4[%c0_53, %c0_54] : memref<1x128xf32, #tpu.memory_space<vmem>>, vector<1x128xf32>
    %59 = vector.broadcast %58 : vector<1x128xf32> to vector<32x128xf32>
    %60 = arith.mulf %57, %59 : vector<32x128xf32>
    %c0_55 = arith.constant 0 : index
    %c0_56 = arith.constant 0 : index
    %61 = vector.load %arg5[%c0_55, %c0_56] : memref<1x128xf32, #tpu.memory_space<vmem>>, vector<1x128xf32>
    %62 = vector.broadcast %61 : vector<1x128xf32> to vector<32x128xf32>
    %63 = arith.addf %60, %62 : vector<32x128xf32>
    %cst_57 = arith.constant 0.000000e+00 : f32
    %64 = vector.broadcast %cst_57 : f32 to vector<32x128xf32>
    %65 = arith.maximumf %63, %64 : vector<32x128xf32>
    %c0_58 = arith.constant 0 : index
    %c0_59 = arith.constant 0 : index
    %c0_60 = arith.constant 0 : index
    %66 = vector.load %arg6[%c0_58, %c0_59, %c0_60] : memref<1x32x128xf32, #tpu.memory_space<vmem>>, vector<1x32x128xf32>
    %67 = vector.shape_cast %66 : vector<1x32x128xf32> to vector<32x128xf32>
    %68 = vector.shape_cast %65 : vector<32x128xf32> to vector<1x32x128xf32>
    tpu.vector_store %arg6[%c0_58, %c0_59, %c0_60], %68 {strides = array<i32>} : memref<1x32x128xf32, #tpu.memory_space<vmem>>, vector<1x32x128xf32>,
    return
  }
  func.func @transform_0(%arg0: i32, %arg1: i32) -> (i32, i32, i32, i32, i32) {
    %c0_i32 = arith.constant 0 : i32
    %c0_i32_0 = arith.constant 0 : i32
    %c0_i32_1 = arith.constant 0 : i32
    %c0_i32_2 = arith.constant 0 : i32
    %c0_i32_3 = arith.constant 0 : i32
    return %arg0, %c0_i32, %c0_i32_0, %c0_i32_1, %c0_i32_2 : i32, i32, i32, i32, i32
  }
  func.func @transform_1(%arg0: i32, %arg1: i32) -> (i32, i32) {
    %c0_i32 = arith.constant 0 : i32
    %c0_i32_0 = arith.constant 0 : i32
    %c0_i32_1 = arith.constant 0 : i32
    return %c0_i32, %c0_i32_0 : i32, i32
  }
  func.func @transform_2(%arg0: i32, %arg1: i32) -> (i32, i32) {
    %c0_i32 = arith.constant 0 : i32
    %c0_i32_0 = arith.constant 0 : i32
    %c0_i32_1 = arith.constant 0 : i32
    return %c0_i32, %c0_i32_0 : i32, i32
  }
  func.func @transform_3(%arg0: i32, %arg1: i32) -> (i32, i32) {
    %c0_i32 = arith.constant 0 : i32
    %c0_i32_0 = arith.constant 0 : i32
    %c0_i32_1 = arith.constant 0 : i32
    return %c0_i32, %c0_i32_0 : i32, i32
  }
  func.func @transform_4(%arg0: i32, %arg1: i32) -> (i32, i32, i32) {
    %c0_i32 = arith.constant 0 : i32
    %c0_i32_0 = arith.constant 0 : i32
    return %arg0, %arg1, %c0_i32 : i32, i32, i32
  }
}

module attributes {stable_mosaic.version = 11 : i64} {
  func.func @_fused_conv_bn_kernel(%arg0: i32, %arg1: i32, %arg2: memref<1x1x10x10x128xf32, #tpu.memory_space<vmem>>, %arg3: memref<1152x128xf32, #tpu.memory_space<vmem>>, %arg4: memref<1x128xf32, #tpu.memory_space<vmem>>, %arg5: memref<1x128xf32, #tpu.memory_space<vmem>>, %arg6: memref<1x32x128xf32, #tpu.memory_space<vmem>>, %arg7: memref<128x128xf32, #tpu.memory_space<vmem>>, %arg8: memref<1x128xf32, #tpu.memory_space<vmem>>, %arg9: memref<1x128xf32, #tpu.memory_space<vmem>>, %arg10: memref<1x32x128xf32, #tpu.memory_space<vmem>>, %arg11: memref<32x1152xf32, #tpu.memory_space<vmem>>) attributes {dimension_semantics = [#tpu.dimension_semantics<parallel>, #tpu.dimension_semantics<parallel>], iteration_bounds = array<i64: 2, 2>, scalar_prefetch = 0 : i64, scratch_operands = 1 : i64, tpu.core_type = #tpu.core_type<tc>, window_params = [{transform_indices = @transform_0, window_bounds = array<i64: 1, 1, 10, 10, 128>}, {pipeline_mode = #tpu.pipeline_mode<synchronous>, transform_indices = @transform_1, window_bounds = array<i64: 1152, 128>}, {pipeline_mode = #tpu.pipeline_mode<synchronous>, transform_indices = @transform_2, window_bounds = array<i64: 1, 128>}, {pipeline_mode = #tpu.pipeline_mode<synchronous>, transform_indices = @transform_3, window_bounds = array<i64: 1, 128>}, {transform_indices = @transform_4, window_bounds = array<i64: 1, 32, 128>}, {pipeline_mode = #tpu.pipeline_mode<synchronous>, transform_indices = @transform_5, window_bounds = array<i64: 128, 128>}, {pipeline_mode = #tpu.pipeline_mode<synchronous>, transform_indices = @transform_6, window_bounds = array<i64: 1, 128>}, {pipeline_mode = #tpu.pipeline_mode<synchronous>, transform_indices = @transform_7, window_bounds = array<i64: 1, 128>}, {transform_indices = @transform_8, window_bounds = array<i64: 1, 32, 128>}]} {
    %c4_i32 = arith.constant 4 : i32
    %0 = arith.muli %arg1, %c4_i32 : i32
    %c0_i32 = arith.constant 0 : i32
    %1 = arith.addi %0, %c0_i32 : i32
    %c0 = arith.constant 0 : index
    %c0_0 = arith.constant 0 : index
    %2 = arith.index_cast %1 : i32 to index
    %c0_1 = arith.constant 0 : index
    %c0_2 = arith.constant 0 : index
    %3 = vector.load %arg2[%c0, %c0_0, %2, %c0_1, %c0_2] : memref<1x1x10x10x128xf32, #tpu.memory_space<vmem>>, vector<1x1x4x8x128xf32>
    %4 = vector.shape_cast %3 : vector<1x1x4x8x128xf32> to vector<4x8x128xf32>
    %5 = vector.shape_cast %4 : vector<4x8x128xf32> to vector<32x128xf32>
    %c0_3 = arith.constant 0 : index
    %c0_4 = arith.constant 0 : index
    %6 = vector.load %arg11[%c0_3, %c0_4] : memref<32x1152xf32, #tpu.memory_space<vmem>>, vector<32x128xf32>
    tpu.vector_store %arg11[%c0_3, %c0_4], %5 {strides = array<i32>} : memref<32x1152xf32, #tpu.memory_space<vmem>>, vector<32x128xf32>,
    %c0_i32_5 = arith.constant 0 : i32
    %7 = arith.addi %0, %c0_i32_5 : i32
    %c0_6 = arith.constant 0 : index
    %c0_7 = arith.constant 0 : index
    %8 = arith.index_cast %7 : i32 to index
    %c1 = arith.constant 1 : index
    %c0_8 = arith.constant 0 : index
    %9 = vector.load %arg2[%c0_6, %c0_7, %8, %c1, %c0_8] : memref<1x1x10x10x128xf32, #tpu.memory_space<vmem>>, vector<1x1x4x8x128xf32>
    %10 = vector.shape_cast %9 : vector<1x1x4x8x128xf32> to vector<4x8x128xf32>
    %11 = vector.shape_cast %10 : vector<4x8x128xf32> to vector<32x128xf32>
    %c0_9 = arith.constant 0 : index
    %c128 = arith.constant 128 : index
    %12 = vector.load %arg11[%c0_9, %c128] : memref<32x1152xf32, #tpu.memory_space<vmem>>, vector<32x128xf32>
    tpu.vector_store %arg11[%c0_9, %c128], %11 {strides = array<i32>} : memref<32x1152xf32, #tpu.memory_space<vmem>>, vector<32x128xf32>,
    %c0_i32_10 = arith.constant 0 : i32
    %13 = arith.addi %0, %c0_i32_10 : i32
    %c0_11 = arith.constant 0 : index
    %c0_12 = arith.constant 0 : index
    %14 = arith.index_cast %13 : i32 to index
    %c2 = arith.constant 2 : index
    %c0_13 = arith.constant 0 : index
    %15 = vector.load %arg2[%c0_11, %c0_12, %14, %c2, %c0_13] : memref<1x1x10x10x128xf32, #tpu.memory_space<vmem>>, vector<1x1x4x8x128xf32>
    %16 = vector.shape_cast %15 : vector<1x1x4x8x128xf32> to vector<4x8x128xf32>
    %17 = vector.shape_cast %16 : vector<4x8x128xf32> to vector<32x128xf32>
    %c0_14 = arith.constant 0 : index
    %c256 = arith.constant 256 : index
    %18 = vector.load %arg11[%c0_14, %c256] : memref<32x1152xf32, #tpu.memory_space<vmem>>, vector<32x128xf32>
    tpu.vector_store %arg11[%c0_14, %c256], %17 {strides = array<i32>} : memref<32x1152xf32, #tpu.memory_space<vmem>>, vector<32x128xf32>,
    %c1_i32 = arith.constant 1 : i32
    %19 = arith.addi %0, %c1_i32 : i32
    %c0_15 = arith.constant 0 : index
    %c0_16 = arith.constant 0 : index
    %20 = arith.index_cast %19 : i32 to index
    %c0_17 = arith.constant 0 : index
    %c0_18 = arith.constant 0 : index
    %21 = vector.load %arg2[%c0_15, %c0_16, %20, %c0_17, %c0_18] : memref<1x1x10x10x128xf32, #tpu.memory_space<vmem>>, vector<1x1x4x8x128xf32>
    %22 = vector.shape_cast %21 : vector<1x1x4x8x128xf32> to vector<4x8x128xf32>
    %23 = vector.shape_cast %22 : vector<4x8x128xf32> to vector<32x128xf32>
    %c0_19 = arith.constant 0 : index
    %c384 = arith.constant 384 : index
    %24 = vector.load %arg11[%c0_19, %c384] : memref<32x1152xf32, #tpu.memory_space<vmem>>, vector<32x128xf32>
    tpu.vector_store %arg11[%c0_19, %c384], %23 {strides = array<i32>} : memref<32x1152xf32, #tpu.memory_space<vmem>>, vector<32x128xf32>,
    %c1_i32_20 = arith.constant 1 : i32
    %25 = arith.addi %0, %c1_i32_20 : i32
    %c0_21 = arith.constant 0 : index
    %c0_22 = arith.constant 0 : index
    %26 = arith.index_cast %25 : i32 to index
    %c1_23 = arith.constant 1 : index
    %c0_24 = arith.constant 0 : index
    %27 = vector.load %arg2[%c0_21, %c0_22, %26, %c1_23, %c0_24] : memref<1x1x10x10x128xf32, #tpu.memory_space<vmem>>, vector<1x1x4x8x128xf32>
    %28 = vector.shape_cast %27 : vector<1x1x4x8x128xf32> to vector<4x8x128xf32>
    %29 = vector.shape_cast %28 : vector<4x8x128xf32> to vector<32x128xf32>
    %c0_25 = arith.constant 0 : index
    %c512 = arith.constant 512 : index
    %30 = vector.load %arg11[%c0_25, %c512] : memref<32x1152xf32, #tpu.memory_space<vmem>>, vector<32x128xf32>
    tpu.vector_store %arg11[%c0_25, %c512], %29 {strides = array<i32>} : memref<32x1152xf32, #tpu.memory_space<vmem>>, vector<32x128xf32>,
    %c1_i32_26 = arith.constant 1 : i32
    %31 = arith.addi %0, %c1_i32_26 : i32
    %c0_27 = arith.constant 0 : index
    %c0_28 = arith.constant 0 : index
    %32 = arith.index_cast %31 : i32 to index
    %c2_29 = arith.constant 2 : index
    %c0_30 = arith.constant 0 : index
    %33 = vector.load %arg2[%c0_27, %c0_28, %32, %c2_29, %c0_30] : memref<1x1x10x10x128xf32, #tpu.memory_space<vmem>>, vector<1x1x4x8x128xf32>
    %34 = vector.shape_cast %33 : vector<1x1x4x8x128xf32> to vector<4x8x128xf32>
    %35 = vector.shape_cast %34 : vector<4x8x128xf32> to vector<32x128xf32>
    %c0_31 = arith.constant 0 : index
    %c640 = arith.constant 640 : index
    %36 = vector.load %arg11[%c0_31, %c640] : memref<32x1152xf32, #tpu.memory_space<vmem>>, vector<32x128xf32>
    tpu.vector_store %arg11[%c0_31, %c640], %35 {strides = array<i32>} : memref<32x1152xf32, #tpu.memory_space<vmem>>, vector<32x128xf32>,
    %c2_i32 = arith.constant 2 : i32
    %37 = arith.addi %0, %c2_i32 : i32
    %c0_32 = arith.constant 0 : index
    %c0_33 = arith.constant 0 : index
    %38 = arith.index_cast %37 : i32 to index
    %c0_34 = arith.constant 0 : index
    %c0_35 = arith.constant 0 : index
    %39 = vector.load %arg2[%c0_32, %c0_33, %38, %c0_34, %c0_35] : memref<1x1x10x10x128xf32, #tpu.memory_space<vmem>>, vector<1x1x4x8x128xf32>
    %40 = vector.shape_cast %39 : vector<1x1x4x8x128xf32> to vector<4x8x128xf32>
    %41 = vector.shape_cast %40 : vector<4x8x128xf32> to vector<32x128xf32>
    %c0_36 = arith.constant 0 : index
    %c768 = arith.constant 768 : index
    %42 = vector.load %arg11[%c0_36, %c768] : memref<32x1152xf32, #tpu.memory_space<vmem>>, vector<32x128xf32>
    tpu.vector_store %arg11[%c0_36, %c768], %41 {strides = array<i32>} : memref<32x1152xf32, #tpu.memory_space<vmem>>, vector<32x128xf32>,
    %c2_i32_37 = arith.constant 2 : i32
    %43 = arith.addi %0, %c2_i32_37 : i32
    %c0_38 = arith.constant 0 : index
    %c0_39 = arith.constant 0 : index
    %44 = arith.index_cast %43 : i32 to index
    %c1_40 = arith.constant 1 : index
    %c0_41 = arith.constant 0 : index
    %45 = vector.load %arg2[%c0_38, %c0_39, %44, %c1_40, %c0_41] : memref<1x1x10x10x128xf32, #tpu.memory_space<vmem>>, vector<1x1x4x8x128xf32>
    %46 = vector.shape_cast %45 : vector<1x1x4x8x128xf32> to vector<4x8x128xf32>
    %47 = vector.shape_cast %46 : vector<4x8x128xf32> to vector<32x128xf32>
    %c0_42 = arith.constant 0 : index
    %c896 = arith.constant 896 : index
    %48 = vector.load %arg11[%c0_42, %c896] : memref<32x1152xf32, #tpu.memory_space<vmem>>, vector<32x128xf32>
    tpu.vector_store %arg11[%c0_42, %c896], %47 {strides = array<i32>} : memref<32x1152xf32, #tpu.memory_space<vmem>>, vector<32x128xf32>,
    %c2_i32_43 = arith.constant 2 : i32
    %49 = arith.addi %0, %c2_i32_43 : i32
    %c0_44 = arith.constant 0 : index
    %c0_45 = arith.constant 0 : index
    %50 = arith.index_cast %49 : i32 to index
    %c2_46 = arith.constant 2 : index
    %c0_47 = arith.constant 0 : index
    %51 = vector.load %arg2[%c0_44, %c0_45, %50, %c2_46, %c0_47] : memref<1x1x10x10x128xf32, #tpu.memory_space<vmem>>, vector<1x1x4x8x128xf32>
    %52 = vector.shape_cast %51 : vector<1x1x4x8x128xf32> to vector<4x8x128xf32>
    %53 = vector.shape_cast %52 : vector<4x8x128xf32> to vector<32x128xf32>
    %c0_48 = arith.constant 0 : index
    %c1024 = arith.constant 1024 : index
    %54 = vector.load %arg11[%c0_48, %c1024] : memref<32x1152xf32, #tpu.memory_space<vmem>>, vector<32x128xf32>
    tpu.vector_store %arg11[%c0_48, %c1024], %53 {strides = array<i32>} : memref<32x1152xf32, #tpu.memory_space<vmem>>, vector<32x128xf32>,
    %c0_49 = arith.constant 0 : index
    %c0_50 = arith.constant 0 : index
    %55 = vector.load %arg11[%c0_49, %c0_50] : memref<32x1152xf32, #tpu.memory_space<vmem>>, vector<32x1152xf32>
    %c0_51 = arith.constant 0 : index
    %c0_52 = arith.constant 0 : index
    %56 = vector.load %arg3[%c0_51, %c0_52] : memref<1152x128xf32, #tpu.memory_space<vmem>>, vector<1152x128xf32>
    %cst = arith.constant dense<0.000000e+00> : vector<32x128xf32>
    %57 = tpu.matmul %55, %56, %cst {dimension_numbers = #tpu.dot_dimension_numbers<[1], [0], [0], [1], [0, 0, 1, 1], [], []>} : vector<32x1152xf32>, vector<1152x128xf32>, vector<32x128xf32> -> vector<32x128xf32>
    %c0_53 = arith.constant 0 : index
    %c0_54 = arith.constant 0 : index
    %58 = vector.load %arg4[%c0_53, %c0_54] : memref<1x128xf32, #tpu.memory_space<vmem>>, vector<1x128xf32>
    %59 = vector.broadcast %58 : vector<1x128xf32> to vector<32x128xf32>
    %60 = arith.mulf %57, %59 : vector<32x128xf32>
    %c0_55 = arith.constant 0 : index
    %c0_56 = arith.constant 0 : index
    %61 = vector.load %arg5[%c0_55, %c0_56] : memref<1x128xf32, #tpu.memory_space<vmem>>, vector<1x128xf32>
    %62 = vector.broadcast %61 : vector<1x128xf32> to vector<32x128xf32>
    %63 = arith.addf %60, %62 : vector<32x128xf32>
    %c0_57 = arith.constant 0 : index
    %c0_58 = arith.constant 0 : index
    %c0_59 = arith.constant 0 : index
    %64 = vector.load %arg6[%c0_57, %c0_58, %c0_59] : memref<1x32x128xf32, #tpu.memory_space<vmem>>, vector<1x32x128xf32>
    %65 = vector.shape_cast %64 : vector<1x32x128xf32> to vector<32x128xf32>
    %c0_60 = arith.constant 0 : index
    %c0_61 = arith.constant 0 : index
    %66 = vector.load %arg7[%c0_60, %c0_61] : memref<128x128xf32, #tpu.memory_space<vmem>>, vector<128x128xf32>
    %cst_62 = arith.constant dense<0.000000e+00> : vector<32x128xf32>
    %67 = tpu.matmul %65, %66, %cst_62 {dimension_numbers = #tpu.dot_dimension_numbers<[1], [0], [0], [1], [0, 0, 1, 1], [], []>} : vector<32x128xf32>, vector<128x128xf32>, vector<32x128xf32> -> vector<32x128xf32>
    %c0_63 = arith.constant 0 : index
    %c0_64 = arith.constant 0 : index
    %68 = vector.load %arg8[%c0_63, %c0_64] : memref<1x128xf32, #tpu.memory_space<vmem>>, vector<1x128xf32>
    %69 = vector.broadcast %68 : vector<1x128xf32> to vector<32x128xf32>
    %70 = arith.mulf %67, %69 : vector<32x128xf32>
    %71 = arith.addf %63, %70 : vector<32x128xf32>
    %c0_65 = arith.constant 0 : index
    %c0_66 = arith.constant 0 : index
    %72 = vector.load %arg9[%c0_65, %c0_66] : memref<1x128xf32, #tpu.memory_space<vmem>>, vector<1x128xf32>
    %73 = vector.broadcast %72 : vector<1x128xf32> to vector<32x128xf32>
    %74 = arith.addf %71, %73 : vector<32x128xf32>
    %cst_67 = arith.constant 0.000000e+00 : f32
    %75 = vector.broadcast %cst_67 : f32 to vector<32x128xf32>
    %76 = arith.maximumf %74, %75 : vector<32x128xf32>
    %c0_68 = arith.constant 0 : index
    %c0_69 = arith.constant 0 : index
    %c0_70 = arith.constant 0 : index
    %77 = vector.load %arg10[%c0_68, %c0_69, %c0_70] : memref<1x32x128xf32, #tpu.memory_space<vmem>>, vector<1x32x128xf32>
    %78 = vector.shape_cast %77 : vector<1x32x128xf32> to vector<32x128xf32>
    %79 = vector.shape_cast %76 : vector<32x128xf32> to vector<1x32x128xf32>
    tpu.vector_store %arg10[%c0_68, %c0_69, %c0_70], %79 {strides = array<i32>} : memref<1x32x128xf32, #tpu.memory_space<vmem>>, vector<1x32x128xf32>,
    return
  }
  func.func @transform_0(%arg0: i32, %arg1: i32) -> (i32, i32, i32, i32, i32) {
    %c0_i32 = arith.constant 0 : i32
    %c0_i32_0 = arith.constant 0 : i32
    %c0_i32_1 = arith.constant 0 : i32
    %c0_i32_2 = arith.constant 0 : i32
    %c0_i32_3 = arith.constant 0 : i32
    return %arg0, %c0_i32, %c0_i32_0, %c0_i32_1, %c0_i32_2 : i32, i32, i32, i32, i32
  }
  func.func @transform_1(%arg0: i32, %arg1: i32) -> (i32, i32) {
    %c0_i32 = arith.constant 0 : i32
    %c0_i32_0 = arith.constant 0 : i32
    %c0_i32_1 = arith.constant 0 : i32
    return %c0_i32, %c0_i32_0 : i32, i32
  }
  func.func @transform_2(%arg0: i32, %arg1: i32) -> (i32, i32) {
    %c0_i32 = arith.constant 0 : i32
    %c0_i32_0 = arith.constant 0 : i32
    %c0_i32_1 = arith.constant 0 : i32
    return %c0_i32, %c0_i32_0 : i32, i32
  }
  func.func @transform_3(%arg0: i32, %arg1: i32) -> (i32, i32) {
    %c0_i32 = arith.constant 0 : i32
    %c0_i32_0 = arith.constant 0 : i32
    %c0_i32_1 = arith.constant 0 : i32
    return %c0_i32, %c0_i32_0 : i32, i32
  }
  func.func @transform_4(%arg0: i32, %arg1: i32) -> (i32, i32, i32) {
    %c0_i32 = arith.constant 0 : i32
    %c0_i32_0 = arith.constant 0 : i32
    return %arg0, %arg1, %c0_i32 : i32, i32, i32
  }
  func.func @transform_5(%arg0: i32, %arg1: i32) -> (i32, i32) {
    %c0_i32 = arith.constant 0 : i32
    %c0_i32_0 = arith.constant 0 : i32
    %c0_i32_1 = arith.constant 0 : i32
    return %c0_i32, %c0_i32_0 : i32, i32
  }
  func.func @transform_6(%arg0: i32, %arg1: i32) -> (i32, i32) {
    %c0_i32 = arith.constant 0 : i32
    %c0_i32_0 = arith.constant 0 : i32
    %c0_i32_1 = arith.constant 0 : i32
    return %c0_i32, %c0_i32_0 : i32, i32
  }
  func.func @transform_7(%arg0: i32, %arg1: i32) -> (i32, i32) {
    %c0_i32 = arith.constant 0 : i32
    %c0_i32_0 = arith.constant 0 : i32
    %c0_i32_1 = arith.constant 0 : i32
    return %c0_i32, %c0_i32_0 : i32, i32
  }
  func.func @transform_8(%arg0: i32, %arg1: i32) -> (i32, i32, i32) {
    %c0_i32 = arith.constant 0 : i32
    %c0_i32_0 = arith.constant 0 : i32
    return %arg0, %arg1, %c0_i32 : i32, i32, i32
  }
}

</mosaic_0001>

<llo_original>
// kernel: basic_block_forward.2
$region0: #{basic_block_forward.2}
  #allocation0 [shape = 'u32[]', space=smem, size = 0x4, offset = 0x4, fixed_abs, tag = 'smem constant byte address 0x4 - core index']
  #allocation1 [shape = 'u32[144,128]{1,0:T(1,128)}', space=vmem, size = 0x12000, scoped, tag = 'internal scratch']
  #allocation2 [shape = 'f32[32,1152]{1,0:T(8,128)}', space=vmem, size = 0x24000, scoped, tag = 'scratch operand']
  %s0 = inlined_call_operand.vmem [shape: f32[2,4,9,9,128], index: 0, kind: input, shape index: {}]
  %s1 = inlined_call_operand.vmem [shape: f32[1152,128], index: 1, kind: input, shape index: {}]
  %s2 = inlined_call_operand.vmem [shape: f32[1,128], index: 2, kind: input, shape index: {}]
  %s3 = inlined_call_operand.vmem [shape: f32[1,128], index: 3, kind: input, shape index: {}]
  %s4 = inlined_call_operand.vmem [shape: f32[2,64,128], index: 4, kind: output, shape index: {}]
  %s5 = sld [smem:[#allocation0]]
  $region49: #{basic_block_forward.2} parent=0
    _
  %s7 = ssub.s32 1, %s5
  %s8 = scalar_select 0, %s7, %s5
  loop: start=0, step=1, limit=6
  $region2: #{basic_block_forward.2} parent=0 // loop_pre_header
    _
  $region3: #{basic_block_forward.2} parent=0 // loop_header
    %s10 = sphi 0, %s14
    %p11 = scmp.ge.s32.totalorder %s10, 6
    %s17 = sphi 0, %s29
    %s18 = sphi 0, %s25
    %s19 = sphi 0, %s17
    %s20 = sphi 0, %s18
    %s21 = sphi 0, %s19
    %s22 = sphi 0, %s20
    %s32 = sphi 0, %s34
    %s35 = sphi 0, %s32
    %s36 = sphi 0, %s35
    %s52 = sphi 0, %s36
    %s56 = sphi 0, %s56
    %s58 = sphi 0, %s56
    %s59 = sphi 0, %s58
    %s73 = sphi 0, %s59
    %s77 = sphi 0, %s77
    %s79 = sphi 0, %s77
    %s80 = sphi 0, %s79
    %s94 = sphi 0, %s80
    %s98 = sphi 0, %s98
    %s100 = sphi 0, %s98
    %s101 = sphi 0, %s100
    %s115 = sphi 0, %s101
    %s123 = sphi 0, %s125
    %s126 = sphi 0, %s123
    %s127 = sphi 0, %s126
    %s143 = sphi 0, %s127
  $region4: #{basic_block_forward.2} parent=0 // loop_header_branch
    %13 = sbr.rel (%p11) target = $region8
  $region5: #{basic_block_forward.2} parent=0 // loop_body
    %s15 = ssub.s32 %s10, 1
    %s16 = ssub.s32 %s10, 2
    %s23 = sadd.s32 1, %s18
    %p24 = scmp.ge.s32.totalorder %s23, 2
    %s25 = scalar_select %p24, 0, %s23
    %s26 = sadd.s32 1, %s17
    %s27 = scalar_select %p24, %s26, %s17
    %p28 = scmp.ge.s32.totalorder %s27, 2
    %s29 = scalar_select %p28, 0, %s27
    %s30 = ssub.s32 %s17, %s29
    %p31 = scmp.eq.s32.totalorder %s30, 0
    %s33 = sadd.s32 %s32, 1
    %s34 = scalar_select %p31, %s32, %s33
    %p37 = pneg %p31
    %p38 = scmp.eq.s32.totalorder %s10, 3
    %p39 = por %p37, %p38
    %p40 = scmp.ne.s32.totalorder %s32, %s35
    %p41 = scmp.eq.s32.totalorder %s10, 0
    %p42 = por %p40, %p41
    %p43 = scmp.ne.s32.totalorder %s32, %s35
    %p44 = scmp.eq.s32.totalorder %s15, 3
    %p45 = por %p43, %p44
    %p46 = scmp.ne.s32.totalorder %s35, %s36
    %p47 = scmp.eq.s32.totalorder %s15, 0
    %p48 = por %p46, %p47
    %p49 = scmp.ne.s32.totalorder %s35, %s36
    %p50 = scmp.eq.s32.totalorder %s16, 3
    %p51 = por %p49, %p50
    %p53 = scmp.ne.s32.totalorder %s36, %s52
    %p54 = scmp.eq.s32.totalorder %s16, 0
    %p55 = por %p53, %p54
    %s57 = sadd.s32 %s56, 1
    %p60 = scmp.eq.s32.totalorder %s10, 3
    %p61 = scmp.ne.s32.totalorder %s56, %s58
    %p62 = scmp.eq.s32.totalorder %s10, 0
    %p63 = por %p61, %p62
    %p64 = scmp.ne.s32.totalorder %s56, %s58
    %p65 = scmp.eq.s32.totalorder %s15, 3
    %p66 = por %p64, %p65
    %p67 = scmp.ne.s32.totalorder %s58, %s59
    %p68 = scmp.eq.s32.totalorder %s15, 0
    %p69 = por %p67, %p68
    %p70 = scmp.ne.s32.totalorder %s58, %s59
    %p71 = scmp.eq.s32.totalorder %s16, 3
    %p72 = por %p70, %p71
    %p74 = scmp.ne.s32.totalorder %s59, %s73
    %p75 = scmp.eq.s32.totalorder %s16, 0
    %p76 = por %p74, %p75
    %s78 = sadd.s32 %s77, 1
    %p81 = scmp.eq.s32.totalorder %s10, 3
    %p82 = scmp.ne.s32.totalorder %s77, %s79
    %p83 = scmp.eq.s32.totalorder %s10, 0
    %p84 = por %p82, %p83
    %p85 = scmp.ne.s32.totalorder %s77, %s79
    %p86 = scmp.eq.s32.totalorder %s15, 3
    %p87 = por %p85, %p86
    %p88 = scmp.ne.s32.totalorder %s79, %s80
    %p89 = scmp.eq.s32.totalorder %s15, 0
    %p90 = por %p88, %p89
    %p91 = scmp.ne.s32.totalorder %s79, %s80
    %p92 = scmp.eq.s32.totalorder %s16, 3
    %p93 = por %p91, %p92
    %p95 = scmp.ne.s32.totalorder %s80, %s94
    %p96 = scmp.eq.s32.totalorder %s16, 0
    %p97 = por %p95, %p96
    %s99 = sadd.s32 %s98, 1
    %p102 = scmp.eq.s32.totalorder %s10, 3
    %p103 = scmp.ne.s32.totalorder %s98, %s100
    %p104 = scmp.eq.s32.totalorder %s10, 0
    %p105 = por %p103, %p104
    %p106 = scmp.ne.s32.totalorder %s98, %s100
    %p107 = scmp.eq.s32.totalorder %s15, 3
    %p108 = por %p106, %p107
    %p109 = scmp.ne.s32.totalorder %s100, %s101
    %p110 = scmp.eq.s32.totalorder %s15, 0
    %p111 = por %p109, %p110
    %p112 = scmp.ne.s32.totalorder %s100, %s101
    %p113 = scmp.eq.s32.totalorder %s16, 3
    %p114 = por %p112, %p113
    %p116 = scmp.ne.s32.totalorder %s101, %s115
    %p117 = scmp.eq.s32.totalorder %s16, 0
    %p118 = por %p116, %p117
    %s119 = ssub.s32 %s17, %s29
    %s120 = ssub.s32 %s18, %s25
    %s121 = sor.u32 %s119, %s120
    %p122 = scmp.eq.s32.totalorder %s121, 0
    %s124 = sadd.s32 %s123, 1
    %s125 = scalar_select %p122, %s123, %s124
    %p128 = pneg %p122
    %p129 = scmp.eq.s32.totalorder %s10, 3
    %p130 = por %p128, %p129
    %p131 = scmp.ne.s32.totalorder %s123, %s126
    %p132 = scmp.eq.s32.totalorder %s10, 0
    %p133 = por %p131, %p132
    %p134 = scmp.ne.s32.totalorder %s123, %s126
    %p135 = scmp.eq.s32.totalorder %s15, 3
    %p136 = por %p134, %p135
    %p137 = scmp.ne.s32.totalorder %s126, %s127
    %p138 = scmp.eq.s32.totalorder %s15, 0
    %p139 = por %p137, %p138
    %p140 = scmp.ne.s32.totalorder %s126, %s127
    %p141 = scmp.eq.s32.totalorder %s16, 3
    %p142 = por %p140, %p141
    %p144 = scmp.ne.s32.totalorder %s127, %s143
    %p145 = scmp.eq.s32.totalorder %s16, 0
    %p146 = por %p144, %p145
    %p147 = scmp.le.s32.totalorder 1, %s10
    %p148 = scmp.lt.s32.totalorder %s10, 5
    %p149 = pnand %p147, %p148
    %p150 = pneg %p149
    // Predicated region
    $region9: #{basic_block_forward.2} parent=5 // pred_check
      _
    $region10: #{basic_block_forward.2} parent=5 // pred_check_branch
      %152 = sbr.rel (%p149) target = $region12
    $region11: #{basic_block_forward.2} parent=5 // pred_region
      %s153 = ssub.s32 %s10, 1
      // Predicated region
      $region13: #{basic_block_forward.2} parent=11 // pred_check
        %p154 = pneg %p69
      $region14: #{basic_block_forward.2} parent=11 // pred_check_branch
        %156 = sbr.rel (%p154) target = $region16
      $region15: #{basic_block_forward.2} parent=11 // pred_region
        _
      $region16: #{basic_block_forward.2} parent=11 // pred_fallthru
        _
      // Predicated region
      $region17: #{basic_block_forward.2} parent=11 // pred_check
        %p157 = pneg %p90
      $region18: #{basic_block_forward.2} parent=11 // pred_check_branch
        %159 = sbr.rel (%p157) target = $region20
      $region19: #{basic_block_forward.2} parent=11 // pred_region
        _
      $region20: #{basic_block_forward.2} parent=11 // pred_fallthru
        _
      // Predicated region
      $region21: #{basic_block_forward.2} parent=11 // pred_check
        %p160 = pneg %p111
      $region22: #{basic_block_forward.2} parent=11 // pred_check_branch
        %162 = sbr.rel (%p160) target = $region24
      $region23: #{basic_block_forward.2} parent=11 // pred_region
        _
      $region24: #{basic_block_forward.2} parent=11 // pred_fallthru
        _
    $region12: #{basic_block_forward.2} parent=5 // pred_fallthru
      _
    %p163 = scmp.lt.s32.totalorder %s10, 4
    // Predicated region
    $region25: #{basic_block_forward.2} parent=5 // pred_check
      %p164 = pneg %p163
    $region26: #{basic_block_forward.2} parent=5 // pred_check_branch
      %166 = sbr.rel (%p164) target = $region28
    $region27: #{basic_block_forward.2} parent=5 // pred_region
      // Predicated region
      $region29: #{basic_block_forward.2} parent=27 // pred_check
        %p167 = pneg %p42
      $region30: #{basic_block_forward.2} parent=27 // pred_check_branch
        %169 = sbr.rel (%p167) target = $region32
      $region31: #{basic_block_forward.2} parent=27 // pred_region
        %p170 = scmp.lt.s32.totalorder %s17, 1
        %s171 = scalar_select %p170, %s17, 1
        %s172 = smul.addr %s171, 72
        %s173 = smul.addr %s172, 8
        %s174 = scalar_lea.vmem %s0, %s173
      $region32: #{basic_block_forward.2} parent=27 // pred_fallthru
        _
    $region28: #{basic_block_forward.2} parent=5 // pred_fallthru
      _
    %p175 = scmp.le.s32.totalorder 1, %s10
    %p176 = scmp.lt.s32.totalorder %s10, 5
    %p177 = pnand %p175, %p176
    %p178 = pneg %p177
    // Predicated region
    $region33: #{basic_block_forward.2} parent=5 // pred_check
      _
    $region34: #{basic_block_forward.2} parent=5 // pred_check_branch
      %180 = sbr.rel (%p177) target = $region36
    $region35: #{basic_block_forward.2} parent=5 // pred_region
      %s181 = ssub.s32 %s10, 1
      %p182 = scmp.lt.s32.totalorder %s19, 1
      %s183 = scalar_select %p182, %s19, 1
      %s184 = smul.addr %s183, 72
      %s185 = smul.addr %s184, 8
      %s186 = scalar_lea.vmem %s0, %s185
      %p187 = pneg %p48
      %p188 = pneg %p45
      %p189 = pneg %p69
      %p190 = pneg %p66
      %p191 = pneg %p90
      %p192 = pneg %p87
      %p193 = pneg %p111
      %p194 = pneg %p108
      %p195 = pneg %p139
      %p196 = pneg %p136
      %s197 = smul.u32 4, %s20
      %p198 = scmp.lt.s32.totalorder %s19, 1
      %s199 = scalar_select %p198, %s19, 1
      %p200 = scmp.lt.s32.totalorder %s197, 7
      %s201 = scalar_select %p200, %s197, 7
      %s202 = smul.addr %s199, 8
      %s203 = sadd.s32 %s201, %s202
      %s204 = smul.addr %s203, 8
      %s205 = scalar_lea.vmem %s4, %s204
      %p206 = scmp.lt.s32.totalorder %s19, 1
      %s207 = scalar_select %p206, %s19, 1
      %s208 = smul.addr %s207, 72
      %s209 = smul.addr %s208, 8
      %s210 = scalar_lea.vmem %s0, %s209
      %s211 = smul.u32 4, %s20
      %p212 = scmp.lt.s32.totalorder %s19, 1
      %s213 = scalar_select %p212, %s19, 1
      %p214 = scmp.lt.s32.totalorder %s211, 7
      %s215 = scalar_select %p214, %s211, 7
      %s216 = smul.addr %s213, 8
      %s217 = sadd.s32 %s215, %s216
      %s218 = smul.addr %s217, 8
      %s219 = scalar_lea.vmem %s4, %s218
      %s220 = smul.u32 4, %s20
      %s221 = smul.u32 %s20, 4
      %s222 = smul.u32 %s221, 16
      %s223 = scalar_lea.vmem %s210, %s222
      %v224 = vld [vmem:[%s223] sm:$0xff]
      %v225 = vld [vmem:[%s223 + $0x10] sm:$0xff]
      %v226 = vld [vmem:[%s223 + $0x20] sm:$0xff]
      %v227 = vld [vmem:[%s223 + $0x30] sm:$0xff]
      %228 = vst [vmem:[#allocation2] sm:$0xff] %v224
      %229 = vst [vmem:[#allocation2 + $0x48] sm:$0xff] %v225
      %230 = vst [vmem:[#allocation2 + $0x90] sm:$0xff] %v226
      %231 = vst [vmem:[#allocation2 + $0xd8] sm:$0xff] %v227
      %s232 = sadd.s32 %s222, 144
      %s233 = scalar_lea.vmem %s210, %s232
      %v234 = vld [vmem:[%s233] sm:$0xff]
      %v235 = vld [vmem:[%s233 + $0x10] sm:$0xff]
      %v236 = vld [vmem:[%s233 + $0x20] sm:$0xff]
      %v237 = vld [vmem:[%s233 + $0x30] sm:$0xff]
      %238 = vst [vmem:[#allocation2 + $0x8] sm:$0xff] %v234
      %239 = vst [vmem:[#allocation2 + $0x50] sm:$0xff] %v235
      %240 = vst [vmem:[#allocation2 + $0x98] sm:$0xff] %v236
      %241 = vst [vmem:[#allocation2 + $0xe0] sm:$0xff] %v237
      %v242 = vld [vmem:[%s223 + $0x1] sm:$0xff]
      %v243 = vld [vmem:[%s223 + $0x11] sm:$0xff]
      %v244 = vld [vmem:[%s223 + $0x21] sm:$0xff]
      %v245 = vld [vmem:[%s223 + $0x31] sm:$0xff]
      %246 = vst [vmem:[#allocation2 + $0x10] sm:$0xff] %v242
      %247 = vst [vmem:[#allocation2 + $0x58] sm:$0xff] %v243
      %248 = vst [vmem:[#allocation2 + $0xa0] sm:$0xff] %v244
      %249 = vst [vmem:[#allocation2 + $0xe8] sm:$0xff] %v245
      %s250 = sadd.s32 %s222, 288
      %s251 = scalar_lea.vmem %s210, %s250
      %v252 = vld [vmem:[%s251] sm:$0xff]
      %v253 = vld [vmem:[%s251 + $0x10] sm:$0xff]
      %v254 = vld [vmem:[%s251 + $0x20] sm:$0xff]
      %v255 = vld [vmem:[%s251 + $0x30] sm:$0xff]
      %256 = vst [vmem:[#allocation2 + $0x18] sm:$0xff] %v252
      %257 = vst [vmem:[#allocation2 + $0x60] sm:$0xff] %v253
      %258 = vst [vmem:[#allocation2 + $0xa8] sm:$0xff] %v254
      %259 = vst [vmem:[#allocation2 + $0xf0] sm:$0xff] %v255
      %s260 = sadd.s32 %s222, 432
      %s261 = scalar_lea.vmem %s210, %s260
      %v262 = vld [vmem:[%s261] sm:$0xff]
      %v263 = vld [vmem:[%s261 + $0x10] sm:$0xff]
      %v264 = vld [vmem:[%s261 + $0x20] sm:$0xff]
      %v265 = vld [vmem:[%s261 + $0x30] sm:$0xff]
      %266 = vst [vmem:[#allocation2 + $0x20] sm:$0xff] %v262
      %267 = vst [vmem:[#allocation2 + $0x68] sm:$0xff] %v263
      %268 = vst [vmem:[#allocation2 + $0xb0] sm:$0xff] %v264
      %269 = vst [vmem:[#allocation2 + $0xf8] sm:$0xff] %v265
      %v270 = vld [vmem:[%s251 + $0x1] sm:$0xff]
      %v271 = vld [vmem:[%s251 + $0x11] sm:$0xff]
      %v272 = vld [vmem:[%s251 + $0x21] sm:$0xff]
      %v273 = vld [vmem:[%s251 + $0x31] sm:$0xff]
      %274 = vst [vmem:[#allocation2 + $0x28] sm:$0xff] %v270
      %275 = vst [vmem:[#allocation2 + $0x70] sm:$0xff] %v271
      %276 = vst [vmem:[#allocation2 + $0xb8] sm:$0xff] %v272
      %277 = vst [vmem:[#allocation2 + $0x100] sm:$0xff] %v273
      %s278 = sadd.s32 %s221, 1
      %s279 = smul.u32 %s278, 16
      %s280 = scalar_lea.vmem %s210, %s279
      %v281 = vld [vmem:[%s280] sm:$0xff]
      %v282 = vld [vmem:[%s280 + $0x10] sm:$0xff]
      %v283 = vld [vmem:[%s280 + $0x20] sm:$0xff]
      %v284 = vld [vmem:[%s280 + $0x30] sm:$0xff]
      %285 = vst [vmem:[#allocation2 + $0x30] sm:$0xff] %v281
      %286 = vst [vmem:[#allocation2 + $0x78] sm:$0xff] %v282
      %287 = vst [vmem:[#allocation2 + $0xc0] sm:$0xff] %v283
      %288 = vst [vmem:[#allocation2 + $0x108] sm:$0xff] %v284
      %s289 = sadd.s32 %s279, 144
      %s290 = scalar_lea.vmem %s210, %s289
      %v291 = vld [vmem:[%s290] sm:$0xff]
      %v292 = vld [vmem:[%s290 + $0x10] sm:$0xff]
      %v293 = vld [vmem:[%s290 + $0x20] sm:$0xff]
      %v294 = vld [vmem:[%s290 + $0x30] sm:$0xff]
      %295 = vst [vmem:[#allocation2 + $0x38] sm:$0xff] %v291
      %296 = vst [vmem:[#allocation2 + $0x80] sm:$0xff] %v292
      %297 = vst [vmem:[#allocation2 + $0xc8] sm:$0xff] %v293
      %298 = vst [vmem:[#allocation2 + $0x110] sm:$0xff] %v294
      %v299 = vld [vmem:[%s280 + $0x1] sm:$0xff]
      %v300 = vld [vmem:[%s280 + $0x11] sm:$0xff]
      %v301 = vld [vmem:[%s280 + $0x21] sm:$0xff]
      %v302 = vld [vmem:[%s280 + $0x31] sm:$0xff]
      %303 = vst [vmem:[#allocation2 + $0x40] sm:$0xff] %v299
      %304 = vst [vmem:[#allocation2 + $0x88] sm:$0xff] %v300
      %305 = vst [vmem:[#allocation2 + $0xd0] sm:$0xff] %v301
      %306 = vst [vmem:[#allocation2 + $0x118] sm:$0xff] %v302
      %v307 = vld [vmem:[#allocation2] sm:$0xff]
      %v308 = vld [vmem:[#allocation2 + $0x8] sm:$0xff]
      %v309 = vld [vmem:[#allocation2 + $0x10] sm:$0xff]
      %v310 = vld [vmem:[#allocation2 + $0x18] sm:$0xff]
      %v311 = vld [vmem:[#allocation2 + $0x20] sm:$0xff]
      %v312 = vld [vmem:[#allocation2 + $0x28] sm:$0xff]
      %v313 = vld [vmem:[#allocation2 + $0x30] sm:$0xff]
      %v314 = vld [vmem:[#allocation2 + $0x38] sm:$0xff]
      %v315 = vld [vmem:[#allocation2 + $0x40] sm:$0xff]
      %v316 = vld [vmem:[#allocation2 + $0x48] sm:$0xff]
      %v317 = vld [vmem:[#allocation2 + $0x50] sm:$0xff]
      %v318 = vld [vmem:[#allocation2 + $0x58] sm:$0xff]
      %v319 = vld [vmem:[#allocation2 + $0x60] sm:$0xff]
      %v320 = vld [vmem:[#allocation2 + $0x68] sm:$0xff]
      %v321 = vld [vmem:[#allocation2 + $0x70] sm:$0xff]
      %v322 = vld [vmem:[#allocation2 + $0x78] sm:$0xff]
      %v323 = vld [vmem:[#allocation2 + $0x80] sm:$0xff]
      %v324 = vld [vmem:[#allocation2 + $0x88] sm:$0xff]
      %v325 = vld [vmem:[#allocation2 + $0x90] sm:$0xff]
      %v326 = vld [vmem:[#allocation2 + $0x98] sm:$0xff]
      %v327 = vld [vmem:[#allocation2 + $0xa0] sm:$0xff]
      %v328 = vld [vmem:[#allocation2 + $0xa8] sm:$0xff]
      %v329 = vld [vmem:[#allocation2 + $0xb0] sm:$0xff]
      %v330 = vld [vmem:[#allocation2 + $0xb8] sm:$0xff]
      %v331 = vld [vmem:[#allocation2 + $0xc0] sm:$0xff]
      %v332 = vld [vmem:[#allocation2 + $0xc8] sm:$0xff]
      %v333 = vld [vmem:[#allocation2 + $0xd0] sm:$0xff]
      %v334 = vld [vmem:[#allocation2 + $0xd8] sm:$0xff]
      %v335 = vld [vmem:[#allocation2 + $0xe0] sm:$0xff]
      %v336 = vld [vmem:[#allocation2 + $0xe8] sm:$0xff]
      %v337 = vld [vmem:[#allocation2 + $0xf0] sm:$0xff]
      %v338 = vld [vmem:[#allocation2 + $0xf8] sm:$0xff]
      %v339 = vld [vmem:[#allocation2 + $0x100] sm:$0xff]
      %v340 = vld [vmem:[#allocation2 + $0x108] sm:$0xff]
      %v341 = vld [vmem:[#allocation2 + $0x110] sm:$0xff]
      %v342 = vld [vmem:[#allocation2 + $0x118] sm:$0xff]
      %v343 = vld [vmem:[%s1] sm:$0xff]
      %v344 = vld [vmem:[%s1 + $0x8] sm:$0xff]
      %v345 = vld [vmem:[%s1 + $0x10] sm:$0xff]
      %v346 = vld [vmem:[%s1 + $0x18] sm:$0xff]
      %v347 = vld [vmem:[%s1 + $0x20] sm:$0xff]
      %v348 = vld [vmem:[%s1 + $0x28] sm:$0xff]
      %v349 = vld [vmem:[%s1 + $0x30] sm:$0xff]
      %v350 = vld [vmem:[%s1 + $0x38] sm:$0xff]
      %v351 = vld [vmem:[%s1 + $0x40] sm:$0xff]
      %v352 = vld [vmem:[%s1 + $0x48] sm:$0xff]
      %v353 = vld [vmem:[%s1 + $0x50] sm:$0xff]
      %v354 = vld [vmem:[%s1 + $0x58] sm:$0xff]
      %v355 = vld [vmem:[%s1 + $0x60] sm:$0xff]
      %v356 = vld [vmem:[%s1 + $0x68] sm:$0xff]
      %v357 = vld [vmem:[%s1 + $0x70] sm:$0xff]
      %v358 = vld [vmem:[%s1 + $0x78] sm:$0xff]
      %v359 = vld [vmem:[%s1 + $0x80] sm:$0xff]
      %v360 = vld [vmem:[%s1 + $0x88] sm:$0xff]
      %v361 = vld [vmem:[%s1 + $0x90] sm:$0xff]
      %v362 = vld [vmem:[%s1 + $0x98] sm:$0xff]
      %v363 = vld [vmem:[%s1 + $0xa0] sm:$0xff]
      %v364 = vld [vmem:[%s1 + $0xa8] sm:$0xff]
      %v365 = vld [vmem:[%s1 + $0xb0] sm:$0xff]
      %v366 = vld [vmem:[%s1 + $0xb8] sm:$0xff]
      %v367 = vld [vmem:[%s1 + $0xc0] sm:$0xff]
      %v368 = vld [vmem:[%s1 + $0xc8] sm:$0xff]
      %v369 = vld [vmem:[%s1 + $0xd0] sm:$0xff]
      %v370 = vld [vmem:[%s1 + $0xd8] sm:$0xff]
      %v371 = vld [vmem:[%s1 + $0xe0] sm:$0xff]
      %v372 = vld [vmem:[%s1 + $0xe8] sm:$0xff]
      %v373 = vld [vmem:[%s1 + $0xf0] sm:$0xff]
      %v374 = vld [vmem:[%s1 + $0xf8] sm:$0xff]
      %v375 = vld [vmem:[%s1 + $0x100] sm:$0xff]
      %v376 = vld [vmem:[%s1 + $0x108] sm:$0xff]
      %v377 = vld [vmem:[%s1 + $0x110] sm:$0xff]
      %v378 = vld [vmem:[%s1 + $0x118] sm:$0xff]
      %v379 = vld [vmem:[%s1 + $0x120] sm:$0xff]
      %v380 = vld [vmem:[%s1 + $0x128] sm:$0xff]
      %v381 = vld [vmem:[%s1 + $0x130] sm:$0xff]
      %v382 = vld [vmem:[%s1 + $0x138] sm:$0xff]
      %v383 = vld [vmem:[%s1 + $0x140] sm:$0xff]
      %v384 = vld [vmem:[%s1 + $0x148] sm:$0xff]
      %v385 = vld [vmem:[%s1 + $0x150] sm:$0xff]
      %v386 = vld [vmem:[%s1 + $0x158] sm:$0xff]
      %v387 = vld [vmem:[%s1 + $0x160] sm:$0xff]
      %v388 = vld [vmem:[%s1 + $0x168] sm:$0xff]
      %v389 = vld [vmem:[%s1 + $0x170] sm:$0xff]
      %v390 = vld [vmem:[%s1 + $0x178] sm:$0xff]
      %v391 = vld [vmem:[%s1 + $0x180] sm:$0xff]
      %v392 = vld [vmem:[%s1 + $0x188] sm:$0xff]
      %v393 = vld [vmem:[%s1 + $0x190] sm:$0xff]
      %v394 = vld [vmem:[%s1 + $0x198] sm:$0xff]
      %v395 = vld [vmem:[%s1 + $0x1a0] sm:$0xff]
      %v396 = vld [vmem:[%s1 + $0x1a8] sm:$0xff]
      %v397 = vld [vmem:[%s1 + $0x1b0] sm:$0xff]
      %v398 = vld [vmem:[%s1 + $0x1b8] sm:$0xff]
      %v399 = vld [vmem:[%s1 + $0x1c0] sm:$0xff]
      %v400 = vld [vmem:[%s1 + $0x1c8] sm:$0xff]
      %v401 = vld [vmem:[%s1 + $0x1d0] sm:$0xff]
      %v402 = vld [vmem:[%s1 + $0x1d8] sm:$0xff]
      %v403 = vld [vmem:[%s1 + $0x1e0] sm:$0xff]
      %v404 = vld [vmem:[%s1 + $0x1e8] sm:$0xff]
      %v405 = vld [vmem:[%s1 + $0x1f0] sm:$0xff]
      %v406 = vld [vmem:[%s1 + $0x1f8] sm:$0xff]
      %v407 = vld [vmem:[%s1 + $0x200] sm:$0xff]
      %v408 = vld [vmem:[%s1 + $0x208] sm:$0xff]
      %v409 = vld [vmem:[%s1 + $0x210] sm:$0xff]
      %v410 = vld [vmem:[%s1 + $0x218] sm:$0xff]
      %v411 = vld [vmem:[%s1 + $0x220] sm:$0xff]
      %v412 = vld [vmem:[%s1 + $0x228] sm:$0xff]
      %v413 = vld [vmem:[%s1 + $0x230] sm:$0xff]
      %v414 = vld [vmem:[%s1 + $0x238] sm:$0xff]
      %v415 = vld [vmem:[%s1 + $0x240] sm:$0xff]
      %v416 = vld [vmem:[%s1 + $0x248] sm:$0xff]
      %v417 = vld [vmem:[%s1 + $0x250] sm:$0xff]
      %v418 = vld [vmem:[%s1 + $0x258] sm:$0xff]
      %v419 = vld [vmem:[%s1 + $0x260] sm:$0xff]
      %v420 = vld [vmem:[%s1 + $0x268] sm:$0xff]
      %v421 = vld [vmem:[%s1 + $0x270] sm:$0xff]
      %v422 = vld [vmem:[%s1 + $0x278] sm:$0xff]
      %v423 = vld [vmem:[%s1 + $0x280] sm:$0xff]
      %v424 = vld [vmem:[%s1 + $0x288] sm:$0xff]
      %v425 = vld [vmem:[%s1 + $0x290] sm:$0xff]
      %v426 = vld [vmem:[%s1 + $0x298] sm:$0xff]
      %v427 = vld [vmem:[%s1 + $0x2a0] sm:$0xff]
      %v428 = vld [vmem:[%s1 + $0x2a8] sm:$0xff]
      %v429 = vld [vmem:[%s1 + $0x2b0] sm:$0xff]
      %v430 = vld [vmem:[%s1 + $0x2b8] sm:$0xff]
      %v431 = vld [vmem:[%s1 + $0x2c0] sm:$0xff]
      %v432 = vld [vmem:[%s1 + $0x2c8] sm:$0xff]
      %v433 = vld [vmem:[%s1 + $0x2d0] sm:$0xff]
      %v434 = vld [vmem:[%s1 + $0x2d8] sm:$0xff]
      %v435 = vld [vmem:[%s1 + $0x2e0] sm:$0xff]
      %v436 = vld [vmem:[%s1 + $0x2e8] sm:$0xff]
      %v437 = vld [vmem:[%s1 + $0x2f0] sm:$0xff]
      %v438 = vld [vmem:[%s1 + $0x2f8] sm:$0xff]
      %v439 = vld [vmem:[%s1 + $0x300] sm:$0xff]
      %v440 = vld [vmem:[%s1 + $0x308] sm:$0xff]
      %v441 = vld [vmem:[%s1 + $0x310] sm:$0xff]
      %v442 = vld [vmem:[%s1 + $0x318] sm:$0xff]
      %v443 = vld [vmem:[%s1 + $0x320] sm:$0xff]
      %v444 = vld [vmem:[%s1 + $0x328] sm:$0xff]
      %v445 = vld [vmem:[%s1 + $0x330] sm:$0xff]
      %v446 = vld [vmem:[%s1 + $0x338] sm:$0xff]
      %v447 = vld [vmem:[%s1 + $0x340] sm:$0xff]
      %v448 = vld [vmem:[%s1 + $0x348] sm:$0xff]
      %v449 = vld [vmem:[%s1 + $0x350] sm:$0xff]
      %v450 = vld [vmem:[%s1 + $0x358] sm:$0xff]
      %v451 = vld [vmem:[%s1 + $0x360] sm:$0xff]
      %v452 = vld [vmem:[%s1 + $0x368] sm:$0xff]
      %v453 = vld [vmem:[%s1 + $0x370] sm:$0xff]
      %v454 = vld [vmem:[%s1 + $0x378] sm:$0xff]
      %v455 = vld [vmem:[%s1 + $0x380] sm:$0xff]
      %v456 = vld [vmem:[%s1 + $0x388] sm:$0xff]
      %v457 = vld [vmem:[%s1 + $0x390] sm:$0xff]
      %v458 = vld [vmem:[%s1 + $0x398] sm:$0xff]
      %v459 = vld [vmem:[%s1 + $0x3a0] sm:$0xff]
      %v460 = vld [vmem:[%s1 + $0x3a8] sm:$0xff]
      %v461 = vld [vmem:[%s1 + $0x3b0] sm:$0xff]
      %v462 = vld [vmem:[%s1 + $0x3b8] sm:$0xff]
      %v463 = vld [vmem:[%s1 + $0x3c0] sm:$0xff]
      %v464 = vld [vmem:[%s1 + $0x3c8] sm:$0xff]
      %v465 = vld [vmem:[%s1 + $0x3d0] sm:$0xff]
      %v466 = vld [vmem:[%s1 + $0x3d8] sm:$0xff]
      %v467 = vld [vmem:[%s1 + $0x3e0] sm:$0xff]
      %v468 = vld [vmem:[%s1 + $0x3e8] sm:$0xff]
      %v469 = vld [vmem:[%s1 + $0x3f0] sm:$0xff]
      %v470 = vld [vmem:[%s1 + $0x3f8] sm:$0xff]
      %v471 = vld [vmem:[%s1 + $0x400] sm:$0xff]
      %v472 = vld [vmem:[%s1 + $0x408] sm:$0xff]
      %v473 = vld [vmem:[%s1 + $0x410] sm:$0xff]
      %v474 = vld [vmem:[%s1 + $0x418] sm:$0xff]
      %v475 = vld [vmem:[%s1 + $0x420] sm:$0xff]
      %v476 = vld [vmem:[%s1 + $0x428] sm:$0xff]
      %v477 = vld [vmem:[%s1 + $0x430] sm:$0xff]
      %v478 = vld [vmem:[%s1 + $0x438] sm:$0xff]
      %v479 = vld [vmem:[%s1 + $0x440] sm:$0xff]
      %v480 = vld [vmem:[%s1 + $0x448] sm:$0xff]
      %v481 = vld [vmem:[%s1 + $0x450] sm:$0xff]
      %v482 = vld [vmem:[%s1 + $0x458] sm:$0xff]
      %v483 = vld [vmem:[%s1 + $0x460] sm:$0xff]
      %v484 = vld [vmem:[%s1 + $0x468] sm:$0xff]
      %v485 = vld [vmem:[%s1 + $0x470] sm:$0xff]
      %v486 = vld [vmem:[%s1 + $0x478] sm:$0xff]
      %487 = vmatprep.subr.mxu0 0.0
      %488 = vmatpush1.msra.mxu0 %v343
      %489 = vmatprep.subr.mxu0 0.0
      %490 = vmatpush1.msra.mxu0 %v344
      %491 = vmatprep.subr.mxu0 0.0
      %492 = vmatpush1.msra.mxu0 %v345
      %493 = vmatprep.subr.mxu0 0.0
      %494 = vmatpush1.msra.mxu0 %v346
      %495 = vmatprep.subr.mxu0 0.0
      %496 = vmatpush1.msra.mxu0 %v347
      %497 = vmatprep.subr.mxu0 0.0
      %498 = vmatpush1.msra.mxu0 %v348
      %499 = vmatprep.subr.mxu0 0.0
      %500 = vmatpush1.msra.mxu0 %v349
      %501 = vmatprep.subr.mxu0 0.0
      %502 = vmatpush1.msra.mxu0 %v350
      %503 = vmatprep.subr.mxu0 0.0
      %504 = vmatpush1.msra.mxu0 %v351
      %505 = vmatprep.subr.mxu0 0.0
      %506 = vmatpush1.msra.mxu0 %v352
      %507 = vmatprep.subr.mxu0 0.0
      %508 = vmatpush1.msra.mxu0 %v353
      %509 = vmatprep.subr.mxu0 0.0
      %510 = vmatpush1.msra.mxu0 %v354
      %511 = vmatprep.subr.mxu0 0.0
      %512 = vmatpush1.msra.mxu0 %v355
      %513 = vmatprep.subr.mxu0 0.0
      %514 = vmatpush1.msra.mxu0 %v356
      %515 = vmatprep.subr.mxu0 0.0
      %516 = vmatpush1.msra.mxu0 %v357
      %517 = vmatprep.subr.mxu0 0.0
      %518 = vmatpush1.msra.mxu0 %v358
      %519 = vmatprep.subr.mxu0 0.0
      %520 = vmatpush1.msra.mxu0 %v359
      %521 = vmatprep.subr.mxu0 0.0
      %522 = vmatpush1.msra.mxu0 %v360
      %523 = vmatprep.subr.mxu0 0.0
      %524 = vmatpush1.msra.mxu0 %v361
      %525 = vmatprep.subr.mxu0 0.0
      %526 = vmatpush1.msra.mxu0 %v362
      %527 = vmatprep.subr.mxu0 0.0
      %528 = vmatpush1.msra.mxu0 %v363
      %529 = vmatprep.subr.mxu0 0.0
      %530 = vmatpush1.msra.mxu0 %v364
      %531 = vmatprep.subr.mxu0 0.0
      %532 = vmatpush1.msra.mxu0 %v365
      %533 = vmatprep.subr.mxu0 0.0
      %534 = vmatpush1.msra.mxu0 %v366
      %535 = vmatprep.subr.mxu0 0.0
      %536 = vmatpush1.msra.mxu0 %v367
      %537 = vmatprep.subr.mxu0 0.0
      %538 = vmatpush1.msra.mxu0 %v368
      %539 = vmatprep.subr.mxu0 0.0
      %540 = vmatpush1.msra.mxu0 %v369
      %541 = vmatprep.subr.mxu0 0.0
      %542 = vmatpush1.msra.mxu0 %v370
      %543 = vmatprep.subr.mxu0 0.0
      %544 = vmatpush1.msra.mxu0 %v371
      %545 = vmatprep.subr.mxu0 0.0
      %546 = vmatpush1.msra.mxu0 %v372
      %547 = vmatprep.subr.mxu0 0.0
      %548 = vmatpush1.msra.mxu0 %v373
      %549 = vmatprep.subr.mxu0 0.0
      %550 = vmatpush1.msra.mxu0 %v374
      %551 = vmatprep.mubr.f32.mxu0 %v308
      %552 = vmatmul.mubr.f32.gmra.mrb[0].mxu0 %v307
      %v553 = vpop.f32.mrb[0].mxu0
      %v554 = vadd.f32 0.0, %v553
      %v555 = vpop.f32.mrb[0].mxu0
      %556 = vmatprep.mubr.f32.mxu0 %v317
      %557 = vmatmul.mubr.f32.gmra.mrb[0].mxu0 %v316
      %v558 = vpop.f32.mrb[0].mxu0
      %v559 = vadd.f32 0.0, %v558
      %v560 = vpop.f32.mrb[0].mxu0
      %561 = vmatprep.mubr.f32.mxu0 %v326
      %562 = vmatmul.mubr.f32.gmra.mrb[0].mxu0 %v325
      %v563 = vpop.f32.mrb[0].mxu0
      %v564 = vadd.f32 0.0, %v563
      %v565 = vpop.f32.mrb[0].mxu0
      %566 = vmatprep.mubr.f32.mxu0 %v335
      %567 = vmatmul.mubr.f32.gmra.mrb[0].mxu0 %v334
      %v568 = vpop.f32.mrb[0].mxu0
      %v569 = vadd.f32 0.0, %v568
      %v570 = vpop.f32.mrb[0].mxu0
      %571 = vdwg.mxu0
      %572 = vmatprep.subr.mxu0 0.0
      %573 = vmatpush1.msra.mxu0 %v375
      %574 = vmatprep.subr.mxu0 0.0
      %575 = vmatpush1.msra.mxu0 %v376
      %576 = vmatprep.subr.mxu0 0.0
      %577 = vmatpush1.msra.mxu0 %v377
      %578 = vmatprep.subr.mxu0 0.0
      %579 = vmatpush1.msra.mxu0 %v378
      %580 = vmatprep.subr.mxu0 0.0
      %581 = vmatpush1.msra.mxu0 %v379
      %582 = vmatprep.subr.mxu0 0.0
      %583 = vmatpush1.msra.mxu0 %v380
      %584 = vmatprep.subr.mxu0 0.0
      %585 = vmatpush1.msra.mxu0 %v381
      %586 = vmatprep.subr.mxu0 0.0
      %587 = vmatpush1.msra.mxu0 %v382
      %588 = vmatprep.subr.mxu0 0.0
      %589 = vmatpush1.msra.mxu0 %v383
      %590 = vmatprep.subr.mxu0 0.0
      %591 = vmatpush1.msra.mxu0 %v384
      %592 = vmatprep.subr.mxu0 0.0
      %593 = vmatpush1.msra.mxu0 %v385
      %594 = vmatprep.subr.mxu0 0.0
      %595 = vmatpush1.msra.mxu0 %v386
      %596 = vmatprep.subr.mxu0 0.0
      %597 = vmatpush1.msra.mxu0 %v387
      %598 = vmatprep.subr.mxu0 0.0
      %599 = vmatpush1.msra.mxu0 %v388
      %600 = vmatprep.subr.mxu0 0.0
      %601 = vmatpush1.msra.mxu0 %v389
      %602 = vmatprep.subr.mxu0 0.0
      %603 = vmatpush1.msra.mxu0 %v390
      %604 = vmatprep.subr.mxu0 0.0
      %605 = vmatpush1.msra.mxu0 %v391
      %606 = vmatprep.subr.mxu0 0.0
      %607 = vmatpush1.msra.mxu0 %v392
      %608 = vmatprep.subr.mxu0 0.0
      %609 = vmatpush1.msra.mxu0 %v393
      %610 = vmatprep.subr.mxu0 0.0
      %611 = vmatpush1.msra.mxu0 %v394
      %612 = vmatprep.subr.mxu0 0.0
      %613 = vmatpush1.msra.mxu0 %v395
      %614 = vmatprep.subr.mxu0 0.0
      %615 = vmatpush1.msra.mxu0 %v396
      %616 = vmatprep.subr.mxu0 0.0
      %617 = vmatpush1.msra.mxu0 %v397
      %618 = vmatprep.subr.mxu0 0.0
      %619 = vmatpush1.msra.mxu0 %v398
      %620 = vmatprep.subr.mxu0 0.0
      %621 = vmatpush1.msra.mxu0 %v399
      %622 = vmatprep.subr.mxu0 0.0
      %623 = vmatpush1.msra.mxu0 %v400
      %624 = vmatprep.subr.mxu0 0.0
      %625 = vmatpush1.msra.mxu0 %v401
      %626 = vmatprep.subr.mxu0 0.0
      %627 = vmatpush1.msra.mxu0 %v402
      %628 = vmatprep.subr.mxu0 0.0
      %629 = vmatpush1.msra.mxu0 %v403
      %630 = vmatprep.subr.mxu0 0.0
      %631 = vmatpush1.msra.mxu0 %v404
      %632 = vmatprep.subr.mxu0 0.0
      %633 = vmatpush1.msra.mxu0 %v405
      %634 = vmatprep.subr.mxu0 0.0
      %635 = vmatpush1.msra.mxu0 %v406
      %636 = vmatprep.mubr.f32.mxu0 %v310
      %637 = vmatmul.mubr.f32.gmra.mrb[0].mxu0 %v309
      %v638 = vpop.f32.mrb[0].mxu0
      %v639 = vadd.f32 %v554, %v638
      %v640 = vpop.f32.mrb[0].mxu0
      %641 = vmatprep.mubr.f32.mxu0 %v319
      %642 = vmatmul.mubr.f32.gmra.mrb[0].mxu0 %v318
      %v643 = vpop.f32.mrb[0].mxu0
      %v644 = vadd.f32 %v559, %v643
      %v645 = vpop.f32.mrb[0].mxu0
      %646 = vmatprep.mubr.f32.mxu0 %v328
      %647 = vmatmul.mubr.f32.gmra.mrb[0].mxu0 %v327
      %v648 = vpop.f32.mrb[0].mxu0
      %v649 = vadd.f32 %v564, %v648
      %v650 = vpop.f32.mrb[0].mxu0
      %651 = vmatprep.mubr.f32.mxu0 %v337
      %652 = vmatmul.mubr.f32.gmra.mrb[0].mxu0 %v336
      %v653 = vpop.f32.mrb[0].mxu0
      %v654 = vadd.f32 %v569, %v653
      %v655 = vpop.f32.mrb[0].mxu0
      %656 = vdwg.mxu0
      %657 = vmatprep.subr.mxu0 0.0
      %658 = vmatpush1.msra.mxu0 %v407
      %659 = vmatprep.subr.mxu0 0.0
      %660 = vmatpush1.msra.mxu0 %v408
      %661 = vmatprep.subr.mxu0 0.0
      %662 = vmatpush1.msra.mxu0 %v409
      %663 = vmatprep.subr.mxu0 0.0
      %664 = vmatpush1.msra.mxu0 %v410
      %665 = vmatprep.subr.mxu0 0.0
      %666 = vmatpush1.msra.mxu0 %v411
      %667 = vmatprep.subr.mxu0 0.0
      %668 = vmatpush1.msra.mxu0 %v412
      %669 = vmatprep.subr.mxu0 0.0
      %670 = vmatpush1.msra.mxu0 %v413
      %671 = vmatprep.subr.mxu0 0.0
      %672 = vmatpush1.msra.mxu0 %v414
      %673 = vmatprep.subr.mxu0 0.0
      %674 = vmatpush1.msra.mxu0 %v415
      %675 = vmatprep.subr.mxu0 0.0
      %676 = vmatpush1.msra.mxu0 %v416
      %677 = vmatprep.subr.mxu0 0.0
      %678 = vmatpush1.msra.mxu0 %v417
      %679 = vmatprep.subr.mxu0 0.0
      %680 = vmatpush1.msra.mxu0 %v418
      %681 = vmatprep.subr.mxu0 0.0
      %682 = vmatpush1.msra.mxu0 %v419
      %683 = vmatprep.subr.mxu0 0.0
      %684 = vmatpush1.msra.mxu0 %v420
      %685 = vmatprep.subr.mxu0 0.0
      %686 = vmatpush1.msra.mxu0 %v421
      %687 = vmatprep.subr.mxu0 0.0
      %688 = vmatpush1.msra.mxu0 %v422
      %689 = vmatprep.subr.mxu0 0.0
      %690 = vmatpush1.msra.mxu0 %v423
      %691 = vmatprep.subr.mxu0 0.0
      %692 = vmatpush1.msra.mxu0 %v424
      %693 = vmatprep.subr.mxu0 0.0
      %694 = vmatpush1.msra.mxu0 %v425
      %695 = vmatprep.subr.mxu0 0.0
      %696 = vmatpush1.msra.mxu0 %v426
      %697 = vmatprep.subr.mxu0 0.0
      %698 = vmatpush1.msra.mxu0 %v427
      %699 = vmatprep.subr.mxu0 0.0
      %700 = vmatpush1.msra.mxu0 %v428
      %701 = vmatprep.subr.mxu0 0.0
      %702 = vmatpush1.msra.mxu0 %v429
      %703 = vmatprep.subr.mxu0 0.0
      %704 = vmatpush1.msra.mxu0 %v430
      %705 = vmatprep.subr.mxu0 0.0
      %706 = vmatpush1.msra.mxu0 %v431
      %707 = vmatprep.subr.mxu0 0.0
      %708 = vmatpush1.msra.mxu0 %v432
      %709 = vmatprep.subr.mxu0 0.0
      %710 = vmatpush1.msra.mxu0 %v433
      %711 = vmatprep.subr.mxu0 0.0
      %712 = vmatpush1.msra.mxu0 %v434
      %713 = vmatprep.subr.mxu0 0.0
      %714 = vmatpush1.msra.mxu0 %v435
      %715 = vmatprep.subr.mxu0 0.0
      %716 = vmatpush1.msra.mxu0 %v436
      %717 = vmatprep.subr.mxu0 0.0
      %718 = vmatpush1.msra.mxu0 %v437
      %719 = vmatprep.subr.mxu0 0.0
      %720 = vmatpush1.msra.mxu0 %v438
      %721 = vmatprep.mubr.f32.mxu0 %v312
      %722 = vmatmul.mubr.f32.gmra.mrb[0].mxu0 %v311
      %v723 = vpop.f32.mrb[0].mxu0
      %v724 = vadd.f32 %v639, %v723
      %v725 = vpop.f32.mrb[0].mxu0
      %726 = vmatprep.mubr.f32.mxu0 %v321
      %727 = vmatmul.mubr.f32.gmra.mrb[0].mxu0 %v320
      %v728 = vpop.f32.mrb[0].mxu0
      %v729 = vadd.f32 %v644, %v728
      %v730 = vpop.f32.mrb[0].mxu0
      %731 = vmatprep.mubr.f32.mxu0 %v330
      %732 = vmatmul.mubr.f32.gmra.mrb[0].mxu0 %v329
      %v733 = vpop.f32.mrb[0].mxu0
      %v734 = vadd.f32 %v649, %v733
      %v735 = vpop.f32.mrb[0].mxu0
      %736 = vmatprep.mubr.f32.mxu0 %v339
      %737 = vmatmul.mubr.f32.gmra.mrb[0].mxu0 %v338
      %v738 = vpop.f32.mrb[0].mxu0
      %v739 = vadd.f32 %v654, %v738
      %v740 = vpop.f32.mrb[0].mxu0
      %741 = vdwg.mxu0
      %742 = vmatprep.subr.mxu0 0.0
      %743 = vmatpush1.msra.mxu0 %v439
      %744 = vmatprep.subr.mxu0 0.0
      %745 = vmatpush1.msra.mxu0 %v440
      %746 = vmatprep.subr.mxu0 0.0
      %747 = vmatpush1.msra.mxu0 %v441
      %748 = vmatprep.subr.mxu0 0.0
      %749 = vmatpush1.msra.mxu0 %v442
      %750 = vmatprep.subr.mxu0 0.0
      %751 = vmatpush1.msra.mxu0 %v443
      %752 = vmatprep.subr.mxu0 0.0
      %753 = vmatpush1.msra.mxu0 %v444
      %754 = vmatprep.subr.mxu0 0.0
      %755 = vmatpush1.msra.mxu0 %v445
      %756 = vmatprep.subr.mxu0 0.0
      %757 = vmatpush1.msra.mxu0 %v446
      %758 = vmatprep.subr.mxu0 0.0
      %759 = vmatpush1.msra.mxu0 %v447
      %760 = vmatprep.subr.mxu0 0.0
      %761 = vmatpush1.msra.mxu0 %v448
      %762 = vmatprep.subr.mxu0 0.0
      %763 = vmatpush1.msra.mxu0 %v449
      %764 = vmatprep.subr.mxu0 0.0
      %765 = vmatpush1.msra.mxu0 %v450
      %766 = vmatprep.subr.mxu0 0.0
      %767 = vmatpush1.msra.mxu0 %v451
      %768 = vmatprep.subr.mxu0 0.0
      %769 = vmatpush1.msra.mxu0 %v452
      %770 = vmatprep.subr.mxu0 0.0
      %771 = vmatpush1.msra.mxu0 %v453
      %772 = vmatprep.subr.mxu0 0.0
      %773 = vmatpush1.msra.mxu0 %v454
      %774 = vmatprep.subr.mxu0 0.0
      %775 = vmatpush1.msra.mxu0 %v455
      %776 = vmatprep.subr.mxu0 0.0
      %777 = vmatpush1.msra.mxu0 %v456
      %778 = vmatprep.subr.mxu0 0.0
      %779 = vmatpush1.msra.mxu0 %v457
      %780 = vmatprep.subr.mxu0 0.0
      %781 = vmatpush1.msra.mxu0 %v458
      %782 = vmatprep.subr.mxu0 0.0
      %783 = vmatpush1.msra.mxu0 %v459
      %784 = vmatprep.subr.mxu0 0.0
      %785 = vmatpush1.msra.mxu0 %v460
      %786 = vmatprep.subr.mxu0 0.0
      %787 = vmatpush1.msra.mxu0 %v461
      %788 = vmatprep.subr.mxu0 0.0
      %789 = vmatpush1.msra.mxu0 %v462
      %790 = vmatprep.subr.mxu0 0.0
      %791 = vmatpush1.msra.mxu0 %v463
      %792 = vmatprep.subr.mxu0 0.0
      %793 = vmatpush1.msra.mxu0 %v464
      %794 = vmatprep.subr.mxu0 0.0
      %795 = vmatpush1.msra.mxu0 %v465
      %796 = vmatprep.subr.mxu0 0.0
      %797 = vmatpush1.msra.mxu0 %v466
      %798 = vmatprep.subr.mxu0 0.0
      %799 = vmatpush1.msra.mxu0 %v467
      %800 = vmatprep.subr.mxu0 0.0
      %801 = vmatpush1.msra.mxu0 %v468
      %802 = vmatprep.subr.mxu0 0.0
      %803 = vmatpush1.msra.mxu0 %v469
      %804 = vmatprep.subr.mxu0 0.0
      %805 = vmatpush1.msra.mxu0 %v470
      %806 = vmatprep.mubr.f32.mxu0 %v314
      %807 = vmatmul.mubr.f32.gmra.mrb[0].mxu0 %v313
      %v808 = vpop.f32.mrb[0].mxu0
      %v809 = vadd.f32 %v724, %v808
      %v810 = vpop.f32.mrb[0].mxu0
      %811 = vmatprep.mubr.f32.mxu0 %v323
      %812 = vmatmul.mubr.f32.gmra.mrb[0].mxu0 %v322
      %v813 = vpop.f32.mrb[0].mxu0
      %v814 = vadd.f32 %v729, %v813
      %v815 = vpop.f32.mrb[0].mxu0
      %816 = vmatprep.mubr.f32.mxu0 %v332
      %817 = vmatmul.mubr.f32.gmra.mrb[0].mxu0 %v331
      %v818 = vpop.f32.mrb[0].mxu0
      %v819 = vadd.f32 %v734, %v818
      %v820 = vpop.f32.mrb[0].mxu0
      %821 = vmatprep.mubr.f32.mxu0 %v341
      %822 = vmatmul.mubr.f32.gmra.mrb[0].mxu0 %v340
      %v823 = vpop.f32.mrb[0].mxu0
      %v824 = vadd.f32 %v739, %v823
      %v825 = vpop.f32.mrb[0].mxu0
      %826 = vdwg.mxu0
      %827 = vmatprep.subr.mxu0 0.0
      %828 = vmatpush1.msra.mxu0 %v471
      %829 = vmatprep.subr.mxu0 0.0
      %830 = vmatpush1.msra.mxu0 %v472
      %831 = vmatprep.subr.mxu0 0.0
      %832 = vmatpush1.msra.mxu0 %v473
      %833 = vmatprep.subr.mxu0 0.0
      %834 = vmatpush1.msra.mxu0 %v474
      %835 = vmatprep.subr.mxu0 0.0
      %836 = vmatpush1.msra.mxu0 %v475
      %837 = vmatprep.subr.mxu0 0.0
      %838 = vmatpush1.msra.mxu0 %v476
      %839 = vmatprep.subr.mxu0 0.0
      %840 = vmatpush1.msra.mxu0 %v477
      %841 = vmatprep.subr.mxu0 0.0
      %842 = vmatpush1.msra.mxu0 %v478
      %843 = vmatprep.subr.mxu0 0.0
      %844 = vmatpush1.msra.mxu0 %v479
      %845 = vmatprep.subr.mxu0 0.0
      %846 = vmatpush1.msra.mxu0 %v480
      %847 = vmatprep.subr.mxu0 0.0
      %848 = vmatpush1.msra.mxu0 %v481
      %849 = vmatprep.subr.mxu0 0.0
      %850 = vmatpush1.msra.mxu0 %v482
      %851 = vmatprep.subr.mxu0 0.0
      %852 = vmatpush1.msra.mxu0 %v483
      %853 = vmatprep.subr.mxu0 0.0
      %854 = vmatpush1.msra.mxu0 %v484
      %855 = vmatprep.subr.mxu0 0.0
      %856 = vmatpush1.msra.mxu0 %v485
      %857 = vmatprep.subr.mxu0 0.0
      %858 = vmatpush1.msra.mxu0 %v486
      %859 = vmatprep.subr.mxu0 0.0
      %860 = vmatpush1.msra.mxu0 0.0
      %861 = vmatprep.subr.mxu0 0.0
      %862 = vmatpush1.msra.mxu0 0.0
      %863 = vmatprep.subr.mxu0 0.0
      %864 = vmatpush1.msra.mxu0 0.0
      %865 = vmatprep.subr.mxu0 0.0
      %866 = vmatpush1.msra.mxu0 0.0
      %867 = vmatprep.subr.mxu0 0.0
      %868 = vmatpush1.msra.mxu0 0.0
      %869 = vmatprep.subr.mxu0 0.0
      %870 = vmatpush1.msra.mxu0 0.0
      %871 = vmatprep.subr.mxu0 0.0
      %872 = vmatpush1.msra.mxu0 0.0
      %873 = vmatprep.subr.mxu0 0.0
      %874 = vmatpush1.msra.mxu0 0.0
      %875 = vmatprep.subr.mxu0 0.0
      %876 = vmatpush1.msra.mxu0 0.0
      %877 = vmatprep.subr.mxu0 0.0
      %878 = vmatpush1.msra.mxu0 0.0
      %879 = vmatprep.subr.mxu0 0.0
      %880 = vmatpush1.msra.mxu0 0.0
      %881 = vmatprep.subr.mxu0 0.0
      %882 = vmatpush1.msra.mxu0 0.0
      %883 = vmatprep.subr.mxu0 0.0
      %884 = vmatpush1.msra.mxu0 0.0
      %885 = vmatprep.subr.mxu0 0.0
      %886 = vmatpush1.msra.mxu0 0.0
      %887 = vmatprep.subr.mxu0 0.0
      %888 = vmatpush1.msra.mxu0 0.0
      %889 = vmatprep.subr.mxu0 0.0
      %890 = vmatpush1.msra.mxu0 0.0
      %891 = vmatprep.mubr.f32.mxu0 0.0
      %892 = vmatmul.mubr.f32.gmra.mrb[0].mxu0 %v315
      %v893 = vpop.f32.mrb[0].mxu0
      %v894 = vadd.f32 %v809, %v893
      %v895 = vpop.f32.mrb[0].mxu0
      %896 = vmatprep.mubr.f32.mxu0 0.0
      %897 = vmatmul.mubr.f32.gmra.mrb[0].mxu0 %v324
      %v898 = vpop.f32.mrb[0].mxu0
      %v899 = vadd.f32 %v814, %v898
      %v900 = vpop.f32.mrb[0].mxu0
      %901 = vmatprep.mubr.f32.mxu0 0.0
      %902 = vmatmul.mubr.f32.gmra.mrb[0].mxu0 %v333
      %v903 = vpop.f32.mrb[0].mxu0
      %v904 = vadd.f32 %v819, %v903
      %v905 = vpop.f32.mrb[0].mxu0
      %906 = vmatprep.mubr.f32.mxu0 0.0
      %907 = vmatmul.mubr.f32.gmra.mrb[0].mxu0 %v342
      %v908 = vpop.f32.mrb[0].mxu0
      %v909 = vadd.f32 %v824, %v908
      %v910 = vpop.f32.mrb[0].mxu0
      %911 = vdwg.mxu0
      %v912 = vld [vmem:[%s2] sm:$0x1]
      %v914 = vlaneseq
      %v915 = vshrl.u32 %v914, 7
      %v916 = vsub.s32 0, %v915
      %v917 = vrot.slane %v912, %v916
      %v919 = vmul.f32 %v894, %v917
      %v920 = vmul.f32 %v899, %v917
      %v921 = vmul.f32 %v904, %v917
      %v922 = vmul.f32 %v909, %v917
      %v923 = vld [vmem:[%s3] sm:$0x1]
      %v925 = vlaneseq
      %v926 = vshrl.u32 %v925, 7
      %v927 = vsub.s32 0, %v926
      %v928 = vrot.slane %v923, %v927
      %v930 = vadd.f32 %v919, %v928
      %v931 = vadd.f32 %v920, %v928
      %v932 = vadd.f32 %v921, %v928
      %v933 = vadd.f32 %v922, %v928
      %v934 = vmax.f32 %v930, 0.0
      %v935 = vmax.f32 %v931, 0.0
      %v936 = vmax.f32 %v932, 0.0
      %v937 = vmax.f32 %v933, 0.0
      %938 = vst [vmem:[%s219] sm:$0xff] %v934
      %939 = vst [vmem:[%s219 + $0x8] sm:$0xff] %v935
      %940 = vst [vmem:[%s219 + $0x10] sm:$0xff] %v936
      %941 = vst [vmem:[%s219 + $0x18] sm:$0xff] %v937
      %s942 = smul.u32 4, %s20
      %p943 = scmp.lt.s32.totalorder %s19, 1
      %s944 = scalar_select %p943, %s19, 1
      %p945 = scmp.lt.s32.totalorder %s942, 7
      %s946 = scalar_select %p945, %s942, 7
      %s947 = smul.addr %s944, 8
      %s948 = sadd.s32 %s946, %s947
      %s949 = smul.addr %s948, 8
      %s950 = scalar_lea.vmem %s4, %s949
      // Predicated region
      $region37: #{basic_block_forward.2} parent=35 // pred_check
        %p951 = pneg %p136
      $region38: #{basic_block_forward.2} parent=35 // pred_check_branch
        %953 = sbr.rel (%p951) target = $region40
      $region39: #{basic_block_forward.2} parent=35 // pred_region
        %s954 = smul.u32 4, %s20
      $region40: #{basic_block_forward.2} parent=35 // pred_fallthru
        _
    $region36: #{basic_block_forward.2} parent=5 // pred_fallthru
      _
    %p955 = scmp.le.s32.totalorder 2, %s10
    // Predicated region
    $region41: #{basic_block_forward.2} parent=5 // pred_check
      %p956 = pneg %p955
    $region42: #{basic_block_forward.2} parent=5 // pred_check_branch
      %958 = sbr.rel (%p956) target = $region44
    $region43: #{basic_block_forward.2} parent=5 // pred_region
      %s959 = ssub.s32 %s10, 2
      // Predicated region
      $region45: #{basic_block_forward.2} parent=43 // pred_check
        %p960 = pneg %p142
      $region46: #{basic_block_forward.2} parent=43 // pred_check_branch
        %962 = sbr.rel (%p960) target = $region48
      $region47: #{basic_block_forward.2} parent=43 // pred_region
        %s963 = smul.u32 4, %s22
        %p964 = scmp.lt.s32.totalorder %s21, 1
        %s965 = scalar_select %p964, %s21, 1
        %p966 = scmp.lt.s32.totalorder %s963, 7
        %s967 = scalar_select %p966, %s963, 7
        %s968 = smul.addr %s965, 8
        %s969 = sadd.s32 %s967, %s968
        %s970 = smul.addr %s969, 8
        %s971 = scalar_lea.vmem %s4, %s970
      $region48: #{basic_block_forward.2} parent=43 // pred_fallthru
        _
    $region44: #{basic_block_forward.2} parent=5 // pred_fallthru
      _
  $region6: #{basic_block_forward.2} parent=0 // loop_footer
    %s14 = sadd.s32 1, %s10
  $region7: #{basic_block_forward.2} parent=0 // loop_footer_branch
    %9 = sbr.rel target = $region3
  $region8: #{basic_block_forward.2} parent=0 // loop_exit
    _

// kernel: basic_block_forward.3
$region0: #{basic_block_forward.3}
  #allocation0 [shape = 'u32[]', space=smem, size = 0x4, offset = 0x4, fixed_abs, tag = 'smem constant byte address 0x4 - core index']
  #allocation1 [shape = 'u32[144,128]{1,0:T(1,128)}', space=vmem, size = 0x12000, scoped, tag = 'internal scratch']
  #allocation2 [shape = 'f32[32,1152]{1,0:T(8,128)}', space=vmem, size = 0x24000, scoped, tag = 'scratch operand']
  %s0 = inlined_call_operand.vmem [shape: f32[2,1,10,10,128], index: 0, kind: input, shape index: {}]
  %s1 = inlined_call_operand.vmem [shape: f32[1152,128], index: 1, kind: input, shape index: {}]
  %s2 = inlined_call_operand.vmem [shape: f32[1,128], index: 2, kind: input, shape index: {}]
  %s3 = inlined_call_operand.vmem [shape: f32[1,128], index: 3, kind: input, shape index: {}]
  %s4 = inlined_call_operand.vmem [shape: f32[2,64,128], index: 4, kind: input, shape index: {}]
  %s5 = inlined_call_operand.vmem [shape: f32[128,128], index: 5, kind: input, shape index: {}]
  %s6 = inlined_call_operand.vmem [shape: f32[1,128], index: 6, kind: input, shape index: {}]
  %s7 = inlined_call_operand.vmem [shape: f32[1,128], index: 7, kind: input, shape index: {}]
  %s8 = inlined_call_operand.vmem [shape: f32[2,64,128], index: 8, kind: output, shape index: {}]
  %s9 = sld [smem:[#allocation0]]
  $region65: #{basic_block_forward.3} parent=0
    _
  %s11 = ssub.s32 1, %s9
  %s12 = scalar_select 0, %s11, %s9
  loop: start=0, step=1, limit=6
  $region2: #{basic_block_forward.3} parent=0 // loop_pre_header
    _
  $region3: #{basic_block_forward.3} parent=0 // loop_header
    %s14 = sphi 0, %s18
    %p15 = scmp.ge.s32.totalorder %s14, 6
    %s21 = sphi 0, %s33
    %s22 = sphi 0, %s29
    %s23 = sphi 0, %s21
    %s24 = sphi 0, %s22
    %s25 = sphi 0, %s23
    %s26 = sphi 0, %s24
    %s36 = sphi 0, %s38
    %s39 = sphi 0, %s36
    %s40 = sphi 0, %s39
    %s56 = sphi 0, %s40
    %s60 = sphi 0, %s60
    %s62 = sphi 0, %s60
    %s63 = sphi 0, %s62
    %s77 = sphi 0, %s63
    %s81 = sphi 0, %s81
    %s83 = sphi 0, %s81
    %s84 = sphi 0, %s83
    %s98 = sphi 0, %s84
    %s102 = sphi 0, %s102
    %s104 = sphi 0, %s102
    %s105 = sphi 0, %s104
    %s119 = sphi 0, %s105
    %s127 = sphi 0, %s129
    %s130 = sphi 0, %s127
    %s131 = sphi 0, %s130
    %s147 = sphi 0, %s131
    %s151 = sphi 0, %s151
    %s153 = sphi 0, %s151
    %s154 = sphi 0, %s153
    %s168 = sphi 0, %s154
    %s172 = sphi 0, %s172
    %s174 = sphi 0, %s172
    %s175 = sphi 0, %s174
    %s189 = sphi 0, %s175
    %s193 = sphi 0, %s193
    %s195 = sphi 0, %s193
    %s196 = sphi 0, %s195
    %s210 = sphi 0, %s196
    %s218 = sphi 0, %s220
    %s221 = sphi 0, %s218
    %s222 = sphi 0, %s221
    %s238 = sphi 0, %s222
  $region4: #{basic_block_forward.3} parent=0 // loop_header_branch
    %17 = sbr.rel (%p15) target = $region8
  $region5: #{basic_block_forward.3} parent=0 // loop_body
    %s19 = ssub.s32 %s14, 1
    %s20 = ssub.s32 %s14, 2
    %s27 = sadd.s32 1, %s22
    %p28 = scmp.ge.s32.totalorder %s27, 2
    %s29 = scalar_select %p28, 0, %s27
    %s30 = sadd.s32 1, %s21
    %s31 = scalar_select %p28, %s30, %s21
    %p32 = scmp.ge.s32.totalorder %s31, 2
    %s33 = scalar_select %p32, 0, %s31
    %s34 = ssub.s32 %s21, %s33
    %p35 = scmp.eq.s32.totalorder %s34, 0
    %s37 = sadd.s32 %s36, 1
    %s38 = scalar_select %p35, %s36, %s37
    %p41 = pneg %p35
    %p42 = scmp.eq.s32.totalorder %s14, 3
    %p43 = por %p41, %p42
    %p44 = scmp.ne.s32.totalorder %s36, %s39
    %p45 = scmp.eq.s32.totalorder %s14, 0
    %p46 = por %p44, %p45
    %p47 = scmp.ne.s32.totalorder %s36, %s39
    %p48 = scmp.eq.s32.totalorder %s19, 3
    %p49 = por %p47, %p48
    %p50 = scmp.ne.s32.totalorder %s39, %s40
    %p51 = scmp.eq.s32.totalorder %s19, 0
    %p52 = por %p50, %p51
    %p53 = scmp.ne.s32.totalorder %s39, %s40
    %p54 = scmp.eq.s32.totalorder %s20, 3
    %p55 = por %p53, %p54
    %p57 = scmp.ne.s32.totalorder %s40, %s56
    %p58 = scmp.eq.s32.totalorder %s20, 0
    %p59 = por %p57, %p58
    %s61 = sadd.s32 %s60, 1
    %p64 = scmp.eq.s32.totalorder %s14, 3
    %p65 = scmp.ne.s32.totalorder %s60, %s62
    %p66 = scmp.eq.s32.totalorder %s14, 0
    %p67 = por %p65, %p66
    %p68 = scmp.ne.s32.totalorder %s60, %s62
    %p69 = scmp.eq.s32.totalorder %s19, 3
    %p70 = por %p68, %p69
    %p71 = scmp.ne.s32.totalorder %s62, %s63
    %p72 = scmp.eq.s32.totalorder %s19, 0
    %p73 = por %p71, %p72
    %p74 = scmp.ne.s32.totalorder %s62, %s63
    %p75 = scmp.eq.s32.totalorder %s20, 3
    %p76 = por %p74, %p75
    %p78 = scmp.ne.s32.totalorder %s63, %s77
    %p79 = scmp.eq.s32.totalorder %s20, 0
    %p80 = por %p78, %p79
    %s82 = sadd.s32 %s81, 1
    %p85 = scmp.eq.s32.totalorder %s14, 3
    %p86 = scmp.ne.s32.totalorder %s81, %s83
    %p87 = scmp.eq.s32.totalorder %s14, 0
    %p88 = por %p86, %p87
    %p89 = scmp.ne.s32.totalorder %s81, %s83
    %p90 = scmp.eq.s32.totalorder %s19, 3
    %p91 = por %p89, %p90
    %p92 = scmp.ne.s32.totalorder %s83, %s84
    %p93 = scmp.eq.s32.totalorder %s19, 0
    %p94 = por %p92, %p93
    %p95 = scmp.ne.s32.totalorder %s83, %s84
    %p96 = scmp.eq.s32.totalorder %s20, 3
    %p97 = por %p95, %p96
    %p99 = scmp.ne.s32.totalorder %s84, %s98
    %p100 = scmp.eq.s32.totalorder %s20, 0
    %p101 = por %p99, %p100
    %s103 = sadd.s32 %s102, 1
    %p106 = scmp.eq.s32.totalorder %s14, 3
    %p107 = scmp.ne.s32.totalorder %s102, %s104
    %p108 = scmp.eq.s32.totalorder %s14, 0
    %p109 = por %p107, %p108
    %p110 = scmp.ne.s32.totalorder %s102, %s104
    %p111 = scmp.eq.s32.totalorder %s19, 3
    %p112 = por %p110, %p111
    %p113 = scmp.ne.s32.totalorder %s104, %s105
    %p114 = scmp.eq.s32.totalorder %s19, 0
    %p115 = por %p113, %p114
    %p116 = scmp.ne.s32.totalorder %s104, %s105
    %p117 = scmp.eq.s32.totalorder %s20, 3
    %p118 = por %p116, %p117
    %p120 = scmp.ne.s32.totalorder %s105, %s119
    %p121 = scmp.eq.s32.totalorder %s20, 0
    %p122 = por %p120, %p121
    %s123 = ssub.s32 %s21, %s33
    %s124 = ssub.s32 %s22, %s29
    %s125 = sor.u32 %s123, %s124
    %p126 = scmp.eq.s32.totalorder %s125, 0
    %s128 = sadd.s32 %s127, 1
    %s129 = scalar_select %p126, %s127, %s128
    %p132 = pneg %p126
    %p133 = scmp.eq.s32.totalorder %s14, 3
    %p134 = por %p132, %p133
    %p135 = scmp.ne.s32.totalorder %s127, %s130
    %p136 = scmp.eq.s32.totalorder %s14, 0
    %p137 = por %p135, %p136
    %p138 = scmp.ne.s32.totalorder %s127, %s130
    %p139 = scmp.eq.s32.totalorder %s19, 3
    %p140 = por %p138, %p139
    %p141 = scmp.ne.s32.totalorder %s130, %s131
    %p142 = scmp.eq.s32.totalorder %s19, 0
    %p143 = por %p141, %p142
    %p144 = scmp.ne.s32.totalorder %s130, %s131
    %p145 = scmp.eq.s32.totalorder %s20, 3
    %p146 = por %p144, %p145
    %p148 = scmp.ne.s32.totalorder %s131, %s147
    %p149 = scmp.eq.s32.totalorder %s20, 0
    %p150 = por %p148, %p149
    %s152 = sadd.s32 %s151, 1
    %p155 = scmp.eq.s32.totalorder %s14, 3
    %p156 = scmp.ne.s32.totalorder %s151, %s153
    %p157 = scmp.eq.s32.totalorder %s14, 0
    %p158 = por %p156, %p157
    %p159 = scmp.ne.s32.totalorder %s151, %s153
    %p160 = scmp.eq.s32.totalorder %s19, 3
    %p161 = por %p159, %p160
    %p162 = scmp.ne.s32.totalorder %s153, %s154
    %p163 = scmp.eq.s32.totalorder %s19, 0
    %p164 = por %p162, %p163
    %p165 = scmp.ne.s32.totalorder %s153, %s154
    %p166 = scmp.eq.s32.totalorder %s20, 3
    %p167 = por %p165, %p166
    %p169 = scmp.ne.s32.totalorder %s154, %s168
    %p170 = scmp.eq.s32.totalorder %s20, 0
    %p171 = por %p169, %p170
    %s173 = sadd.s32 %s172, 1
    %p176 = scmp.eq.s32.totalorder %s14, 3
    %p177 = scmp.ne.s32.totalorder %s172, %s174
    %p178 = scmp.eq.s32.totalorder %s14, 0
    %p179 = por %p177, %p178
    %p180 = scmp.ne.s32.totalorder %s172, %s174
    %p181 = scmp.eq.s32.totalorder %s19, 3
    %p182 = por %p180, %p181
    %p183 = scmp.ne.s32.totalorder %s174, %s175
    %p184 = scmp.eq.s32.totalorder %s19, 0
    %p185 = por %p183, %p184
    %p186 = scmp.ne.s32.totalorder %s174, %s175
    %p187 = scmp.eq.s32.totalorder %s20, 3
    %p188 = por %p186, %p187
    %p190 = scmp.ne.s32.totalorder %s175, %s189
    %p191 = scmp.eq.s32.totalorder %s20, 0
    %p192 = por %p190, %p191
    %s194 = sadd.s32 %s193, 1
    %p197 = scmp.eq.s32.totalorder %s14, 3
    %p198 = scmp.ne.s32.totalorder %s193, %s195
    %p199 = scmp.eq.s32.totalorder %s14, 0
    %p200 = por %p198, %p199
    %p201 = scmp.ne.s32.totalorder %s193, %s195
    %p202 = scmp.eq.s32.totalorder %s19, 3
    %p203 = por %p201, %p202
    %p204 = scmp.ne.s32.totalorder %s195, %s196
    %p205 = scmp.eq.s32.totalorder %s19, 0
    %p206 = por %p204, %p205
    %p207 = scmp.ne.s32.totalorder %s195, %s196
    %p208 = scmp.eq.s32.totalorder %s20, 3
    %p209 = por %p207, %p208
    %p211 = scmp.ne.s32.totalorder %s196, %s210
    %p212 = scmp.eq.s32.totalorder %s20, 0
    %p213 = por %p211, %p212
    %s214 = ssub.s32 %s21, %s33
    %s215 = ssub.s32 %s22, %s29
    %s216 = sor.u32 %s214, %s215
    %p217 = scmp.eq.s32.totalorder %s216, 0
    %s219 = sadd.s32 %s218, 1
    %s220 = scalar_select %p217, %s218, %s219
    %p223 = pneg %p217
    %p224 = scmp.eq.s32.totalorder %s14, 3
    %p225 = por %p223, %p224
    %p226 = scmp.ne.s32.totalorder %s218, %s221
    %p227 = scmp.eq.s32.totalorder %s14, 0
    %p228 = por %p226, %p227
    %p229 = scmp.ne.s32.totalorder %s218, %s221
    %p230 = scmp.eq.s32.totalorder %s19, 3
    %p231 = por %p229, %p230
    %p232 = scmp.ne.s32.totalorder %s221, %s222
    %p233 = scmp.eq.s32.totalorder %s19, 0
    %p234 = por %p232, %p233
    %p235 = scmp.ne.s32.totalorder %s221, %s222
    %p236 = scmp.eq.s32.totalorder %s20, 3
    %p237 = por %p235, %p236
    %p239 = scmp.ne.s32.totalorder %s222, %s238
    %p240 = scmp.eq.s32.totalorder %s20, 0
    %p241 = por %p239, %p240
    %p242 = scmp.le.s32.totalorder 1, %s14
    %p243 = scmp.lt.s32.totalorder %s14, 5
    %p244 = pnand %p242, %p243
    %p245 = pneg %p244
    // Predicated region
    $region9: #{basic_block_forward.3} parent=5 // pred_check
      _
    $region10: #{basic_block_forward.3} parent=5 // pred_check_branch
      %247 = sbr.rel (%p244) target = $region12
    $region11: #{basic_block_forward.3} parent=5 // pred_region
      %s248 = ssub.s32 %s14, 1
      // Predicated region
      $region13: #{basic_block_forward.3} parent=11 // pred_check
        %p249 = pneg %p73
      $region14: #{basic_block_forward.3} parent=11 // pred_check_branch
        %251 = sbr.rel (%p249) target = $region16
      $region15: #{basic_block_forward.3} parent=11 // pred_region
        _
      $region16: #{basic_block_forward.3} parent=11 // pred_fallthru
        _
      // Predicated region
      $region17: #{basic_block_forward.3} parent=11 // pred_check
        %p252 = pneg %p94
      $region18: #{basic_block_forward.3} parent=11 // pred_check_branch
        %254 = sbr.rel (%p252) target = $region20
      $region19: #{basic_block_forward.3} parent=11 // pred_region
        _
      $region20: #{basic_block_forward.3} parent=11 // pred_fallthru
        _
      // Predicated region
      $region21: #{basic_block_forward.3} parent=11 // pred_check
        %p255 = pneg %p115
      $region22: #{basic_block_forward.3} parent=11 // pred_check_branch
        %257 = sbr.rel (%p255) target = $region24
      $region23: #{basic_block_forward.3} parent=11 // pred_region
        _
      $region24: #{basic_block_forward.3} parent=11 // pred_fallthru
        _
      // Predicated region
      $region25: #{basic_block_forward.3} parent=11 // pred_check
        %p258 = pneg %p164
      $region26: #{basic_block_forward.3} parent=11 // pred_check_branch
        %260 = sbr.rel (%p258) target = $region28
      $region27: #{basic_block_forward.3} parent=11 // pred_region
        _
      $region28: #{basic_block_forward.3} parent=11 // pred_fallthru
        _
      // Predicated region
      $region29: #{basic_block_forward.3} parent=11 // pred_check
        %p261 = pneg %p185
      $region30: #{basic_block_forward.3} parent=11 // pred_check_branch
        %263 = sbr.rel (%p261) target = $region32
      $region31: #{basic_block_forward.3} parent=11 // pred_region
        _
      $region32: #{basic_block_forward.3} parent=11 // pred_fallthru
        _
      // Predicated region
      $region33: #{basic_block_forward.3} parent=11 // pred_check
        %p264 = pneg %p206
      $region34: #{basic_block_forward.3} parent=11 // pred_check_branch
        %266 = sbr.rel (%p264) target = $region36
      $region35: #{basic_block_forward.3} parent=11 // pred_region
        _
      $region36: #{basic_block_forward.3} parent=11 // pred_fallthru
        _
    $region12: #{basic_block_forward.3} parent=5 // pred_fallthru
      _
    %p267 = scmp.lt.s32.totalorder %s14, 4
    // Predicated region
    $region37: #{basic_block_forward.3} parent=5 // pred_check
      %p268 = pneg %p267
    $region38: #{basic_block_forward.3} parent=5 // pred_check_branch
      %270 = sbr.rel (%p268) target = $region40
    $region39: #{basic_block_forward.3} parent=5 // pred_region
      // Predicated region
      $region41: #{basic_block_forward.3} parent=39 // pred_check
        %p271 = pneg %p46
      $region42: #{basic_block_forward.3} parent=39 // pred_check_branch
        %273 = sbr.rel (%p271) target = $region44
      $region43: #{basic_block_forward.3} parent=39 // pred_region
        %p274 = scmp.lt.s32.totalorder %s21, 1
        %s275 = scalar_select %p274, %s21, 1
        %s276 = smul.addr %s275, 20
        %s277 = smul.addr %s276, 8
        %s278 = scalar_lea.vmem %s0, %s277
      $region44: #{basic_block_forward.3} parent=39 // pred_fallthru
        _
      // Predicated region
      $region45: #{basic_block_forward.3} parent=39 // pred_check
        %p279 = pneg %p137
      $region46: #{basic_block_forward.3} parent=39 // pred_check_branch
        %281 = sbr.rel (%p279) target = $region48
      $region47: #{basic_block_forward.3} parent=39 // pred_region
        %s282 = smul.u32 4, %s22
        %p283 = scmp.lt.s32.totalorder %s21, 1
        %s284 = scalar_select %p283, %s21, 1
        %p285 = scmp.lt.s32.totalorder %s282, 7
        %s286 = scalar_select %p285, %s282, 7
        %s287 = smul.addr %s284, 8
        %s288 = sadd.s32 %s286, %s287
        %s289 = smul.addr %s288, 8
        %s290 = scalar_lea.vmem %s4, %s289
        %s291 = smul.u32 4, %s22
      $region48: #{basic_block_forward.3} parent=39 // pred_fallthru
        _
    $region40: #{basic_block_forward.3} parent=5 // pred_fallthru
      _
    %p292 = scmp.le.s32.totalorder 1, %s14
    %p293 = scmp.lt.s32.totalorder %s14, 5
    %p294 = pnand %p292, %p293
    %p295 = pneg %p294
    // Predicated region
    $region49: #{basic_block_forward.3} parent=5 // pred_check
      _
    $region50: #{basic_block_forward.3} parent=5 // pred_check_branch
      %297 = sbr.rel (%p294) target = $region52
    $region51: #{basic_block_forward.3} parent=5 // pred_region
      %s298 = ssub.s32 %s14, 1
      %p299 = scmp.lt.s32.totalorder %s23, 1
      %s300 = scalar_select %p299, %s23, 1
      %s301 = smul.addr %s300, 20
      %s302 = smul.addr %s301, 8
      %s303 = scalar_lea.vmem %s0, %s302
      %p304 = pneg %p52
      %p305 = pneg %p49
      %p306 = pneg %p73
      %p307 = pneg %p70
      %p308 = pneg %p94
      %p309 = pneg %p91
      %p310 = pneg %p115
      %p311 = pneg %p112
      %s312 = smul.u32 4, %s24
      %p313 = scmp.lt.s32.totalorder %s23, 1
      %s314 = scalar_select %p313, %s23, 1
      %p315 = scmp.lt.s32.totalorder %s312, 7
      %s316 = scalar_select %p315, %s312, 7
      %s317 = smul.addr %s314, 8
      %s318 = sadd.s32 %s316, %s317
      %s319 = smul.addr %s318, 8
      %s320 = scalar_lea.vmem %s4, %s319
      %p321 = pneg %p143
      %p322 = pneg %p140
      %p323 = pneg %p164
      %p324 = pneg %p161
      %p325 = pneg %p185
      %p326 = pneg %p182
      %p327 = pneg %p206
      %p328 = pneg %p203
      %p329 = pneg %p234
      %p330 = pneg %p231
      %s331 = smul.u32 4, %s24
      %p332 = scmp.lt.s32.totalorder %s23, 1
      %s333 = scalar_select %p332, %s23, 1
      %p334 = scmp.lt.s32.totalorder %s331, 7
      %s335 = scalar_select %p334, %s331, 7
      %s336 = smul.addr %s333, 8
      %s337 = sadd.s32 %s335, %s336
      %s338 = smul.addr %s337, 8
      %s339 = scalar_lea.vmem %s8, %s338
      %p340 = scmp.lt.s32.totalorder %s23, 1
      %s341 = scalar_select %p340, %s23, 1
      %s342 = smul.addr %s341, 20
      %s343 = smul.addr %s342, 8
      %s344 = scalar_lea.vmem %s0, %s343
      %s345 = smul.u32 4, %s24
      %p346 = scmp.lt.s32.totalorder %s23, 1
      %s347 = scalar_select %p346, %s23, 1
      %p348 = scmp.lt.s32.totalorder %s345, 7
      %s349 = scalar_select %p348, %s345, 7
      %s350 = smul.addr %s347, 8
      %s351 = sadd.s32 %s349, %s350
      %s352 = smul.addr %s351, 8
      %s353 = scalar_lea.vmem %s4, %s352
      %s354 = smul.u32 4, %s24
      %s355 = smul.u32 4, %s24
      %p356 = scmp.lt.s32.totalorder %s23, 1
      %s357 = scalar_select %p356, %s23, 1
      %p358 = scmp.lt.s32.totalorder %s355, 7
      %s359 = scalar_select %p358, %s355, 7
      %s360 = smul.addr %s357, 8
      %s361 = sadd.s32 %s359, %s360
      %s362 = smul.addr %s361, 8
      %s363 = scalar_lea.vmem %s8, %s362
      %s364 = smul.u32 4, %s24
      %s365 = smul.u32 %s24, 4
      %s366 = smul.u32 %s365, 16
      %s367 = scalar_lea.vmem %s344, %s366
      %v368 = vld [vmem:[%s367] sm:$0xff]
      %v369 = vld [vmem:[%s367 + $0x10] sm:$0xff]
      %v370 = vld [vmem:[%s367 + $0x20] sm:$0xff]
      %v371 = vld [vmem:[%s367 + $0x30] sm:$0xff]
      %372 = vst [vmem:[#allocation2] sm:$0xff] %v368
      %373 = vst [vmem:[#allocation2 + $0x48] sm:$0xff] %v369
      %374 = vst [vmem:[#allocation2 + $0x90] sm:$0xff] %v370
      %375 = vst [vmem:[#allocation2 + $0xd8] sm:$0xff] %v371
      %v376 = vld [vmem:[%s367 + $0x1] sm:$0xff]
      %v377 = vld [vmem:[%s367 + $0x11] sm:$0xff]
      %v378 = vld [vmem:[%s367 + $0x21] sm:$0xff]
      %v379 = vld [vmem:[%s367 + $0x31] sm:$0xff]
      %380 = vst [vmem:[#allocation2 + $0x8] sm:$0xff] %v376
      %381 = vst [vmem:[#allocation2 + $0x50] sm:$0xff] %v377
      %382 = vst [vmem:[#allocation2 + $0x98] sm:$0xff] %v378
      %383 = vst [vmem:[#allocation2 + $0xe0] sm:$0xff] %v379
      %v384 = vld [vmem:[%s367 + $0x2] sm:$0xff]
      %v385 = vld [vmem:[%s367 + $0x12] sm:$0xff]
      %v386 = vld [vmem:[%s367 + $0x22] sm:$0xff]
      %v387 = vld [vmem:[%s367 + $0x32] sm:$0xff]
      %388 = vst [vmem:[#allocation2 + $0x10] sm:$0xff] %v384
      %389 = vst [vmem:[#allocation2 + $0x58] sm:$0xff] %v385
      %390 = vst [vmem:[#allocation2 + $0xa0] sm:$0xff] %v386
      %391 = vst [vmem:[#allocation2 + $0xe8] sm:$0xff] %v387
      %s392 = sadd.s32 %s365, 1
      %s393 = smul.u32 %s392, 16
      %s394 = scalar_lea.vmem %s344, %s393
      %v395 = vld [vmem:[%s394] sm:$0xff]
      %v396 = vld [vmem:[%s394 + $0x10] sm:$0xff]
      %v397 = vld [vmem:[%s394 + $0x20] sm:$0xff]
      %v398 = vld [vmem:[%s394 + $0x30] sm:$0xff]
      %399 = vst [vmem:[#allocation2 + $0x18] sm:$0xff] %v395
      %400 = vst [vmem:[#allocation2 + $0x60] sm:$0xff] %v396
      %401 = vst [vmem:[#allocation2 + $0xa8] sm:$0xff] %v397
      %402 = vst [vmem:[#allocation2 + $0xf0] sm:$0xff] %v398
      %v403 = vld [vmem:[%s394 + $0x1] sm:$0xff]
      %v404 = vld [vmem:[%s394 + $0x11] sm:$0xff]
      %v405 = vld [vmem:[%s394 + $0x21] sm:$0xff]
      %v406 = vld [vmem:[%s394 + $0x31] sm:$0xff]
      %407 = vst [vmem:[#allocation2 + $0x20] sm:$0xff] %v403
      %408 = vst [vmem:[#allocation2 + $0x68] sm:$0xff] %v404
      %409 = vst [vmem:[#allocation2 + $0xb0] sm:$0xff] %v405
      %410 = vst [vmem:[#allocation2 + $0xf8] sm:$0xff] %v406
      %v411 = vld [vmem:[%s394 + $0x2] sm:$0xff]
      %v412 = vld [vmem:[%s394 + $0x12] sm:$0xff]
      %v413 = vld [vmem:[%s394 + $0x22] sm:$0xff]
      %v414 = vld [vmem:[%s394 + $0x32] sm:$0xff]
      %415 = vst [vmem:[#allocation2 + $0x28] sm:$0xff] %v411
      %416 = vst [vmem:[#allocation2 + $0x70] sm:$0xff] %v412
      %417 = vst [vmem:[#allocation2 + $0xb8] sm:$0xff] %v413
      %418 = vst [vmem:[#allocation2 + $0x100] sm:$0xff] %v414
      %s419 = sadd.s32 %s365, 2
      %s420 = smul.u32 %s419, 16
      %s421 = scalar_lea.vmem %s344, %s420
      %v422 = vld [vmem:[%s421] sm:$0xff]
      %v423 = vld [vmem:[%s421 + $0x10] sm:$0xff]
      %v424 = vld [vmem:[%s421 + $0x20] sm:$0xff]
      %v425 = vld [vmem:[%s421 + $0x30] sm:$0xff]
      %426 = vst [vmem:[#allocation2 + $0x30] sm:$0xff] %v422
      %427 = vst [vmem:[#allocation2 + $0x78] sm:$0xff] %v423
      %428 = vst [vmem:[#allocation2 + $0xc0] sm:$0xff] %v424
      %429 = vst [vmem:[#allocation2 + $0x108] sm:$0xff] %v425
      %v430 = vld [vmem:[%s421 + $0x1] sm:$0xff]
      %v431 = vld [vmem:[%s421 + $0x11] sm:$0xff]
      %v432 = vld [vmem:[%s421 + $0x21] sm:$0xff]
      %v433 = vld [vmem:[%s421 + $0x31] sm:$0xff]
      %434 = vst [vmem:[#allocation2 + $0x38] sm:$0xff] %v430
      %435 = vst [vmem:[#allocation2 + $0x80] sm:$0xff] %v431
      %436 = vst [vmem:[#allocation2 + $0xc8] sm:$0xff] %v432
      %437 = vst [vmem:[#allocation2 + $0x110] sm:$0xff] %v433
      %v438 = vld [vmem:[%s421 + $0x2] sm:$0xff]
      %v439 = vld [vmem:[%s421 + $0x12] sm:$0xff]
      %v440 = vld [vmem:[%s421 + $0x22] sm:$0xff]
      %v441 = vld [vmem:[%s421 + $0x32] sm:$0xff]
      %442 = vst [vmem:[#allocation2 + $0x40] sm:$0xff] %v438
      %443 = vst [vmem:[#allocation2 + $0x88] sm:$0xff] %v439
      %444 = vst [vmem:[#allocation2 + $0xd0] sm:$0xff] %v440
      %445 = vst [vmem:[#allocation2 + $0x118] sm:$0xff] %v441
      %v446 = vld [vmem:[#allocation2] sm:$0xff]
      %v447 = vld [vmem:[#allocation2 + $0x8] sm:$0xff]
      %v448 = vld [vmem:[#allocation2 + $0x10] sm:$0xff]
      %v449 = vld [vmem:[#allocation2 + $0x18] sm:$0xff]
      %v450 = vld [vmem:[#allocation2 + $0x20] sm:$0xff]
      %v451 = vld [vmem:[#allocation2 + $0x28] sm:$0xff]
      %v452 = vld [vmem:[#allocation2 + $0x30] sm:$0xff]
      %v453 = vld [vmem:[#allocation2 + $0x38] sm:$0xff]
      %v454 = vld [vmem:[#allocation2 + $0x40] sm:$0xff]
      %v455 = vld [vmem:[#allocation2 + $0x48] sm:$0xff]
      %v456 = vld [vmem:[#allocation2 + $0x50] sm:$0xff]
      %v457 = vld [vmem:[#allocation2 + $0x58] sm:$0xff]
      %v458 = vld [vmem:[#allocation2 + $0x60] sm:$0xff]
      %v459 = vld [vmem:[#allocation2 + $0x68] sm:$0xff]
      %v460 = vld [vmem:[#allocation2 + $0x70] sm:$0xff]
      %v461 = vld [vmem:[#allocation2 + $0x78] sm:$0xff]
      %v462 = vld [vmem:[#allocation2 + $0x80] sm:$0xff]
      %v463 = vld [vmem:[#allocation2 + $0x88] sm:$0xff]
      %v464 = vld [vmem:[#allocation2 + $0x90] sm:$0xff]
      %v465 = vld [vmem:[#allocation2 + $0x98] sm:$0xff]
      %v466 = vld [vmem:[#allocation2 + $0xa0] sm:$0xff]
      %v467 = vld [vmem:[#allocation2 + $0xa8] sm:$0xff]
      %v468 = vld [vmem:[#allocation2 + $0xb0] sm:$0xff]
      %v469 = vld [vmem:[#allocation2 + $0xb8] sm:$0xff]
      %v470 = vld [vmem:[#allocation2 + $0xc0] sm:$0xff]
      %v471 = vld [vmem:[#allocation2 + $0xc8] sm:$0xff]
      %v472 = vld [vmem:[#allocation2 + $0xd0] sm:$0xff]
      %v473 = vld [vmem:[#allocation2 + $0xd8] sm:$0xff]
      %v474 = vld [vmem:[#allocation2 + $0xe0] sm:$0xff]
      %v475 = vld [vmem:[#allocation2 + $0xe8] sm:$0xff]
      %v476 = vld [vmem:[#allocation2 + $0xf0] sm:$0xff]
      %v477 = vld [vmem:[#allocation2 + $0xf8] sm:$0xff]
      %v478 = vld [vmem:[#allocation2 + $0x100] sm:$0xff]
      %v479 = vld [vmem:[#allocation2 + $0x108] sm:$0xff]
      %v480 = vld [vmem:[#allocation2 + $0x110] sm:$0xff]
      %v481 = vld [vmem:[#allocation2 + $0x118] sm:$0xff]
      %v482 = vld [vmem:[%s1] sm:$0xff]
      %v483 = vld [vmem:[%s1 + $0x8] sm:$0xff]
      %v484 = vld [vmem:[%s1 + $0x10] sm:$0xff]
      %v485 = vld [vmem:[%s1 + $0x18] sm:$0xff]
      %v486 = vld [vmem:[%s1 + $0x20] sm:$0xff]
      %v487 = vld [vmem:[%s1 + $0x28] sm:$0xff]
      %v488 = vld [vmem:[%s1 + $0x30] sm:$0xff]
      %v489 = vld [vmem:[%s1 + $0x38] sm:$0xff]
      %v490 = vld [vmem:[%s1 + $0x40] sm:$0xff]
      %v491 = vld [vmem:[%s1 + $0x48] sm:$0xff]
      %v492 = vld [vmem:[%s1 + $0x50] sm:$0xff]
      %v493 = vld [vmem:[%s1 + $0x58] sm:$0xff]
      %v494 = vld [vmem:[%s1 + $0x60] sm:$0xff]
      %v495 = vld [vmem:[%s1 + $0x68] sm:$0xff]
      %v496 = vld [vmem:[%s1 + $0x70] sm:$0xff]
      %v497 = vld [vmem:[%s1 + $0x78] sm:$0xff]
      %v498 = vld [vmem:[%s1 + $0x80] sm:$0xff]
      %v499 = vld [vmem:[%s1 + $0x88] sm:$0xff]
      %v500 = vld [vmem:[%s1 + $0x90] sm:$0xff]
      %v501 = vld [vmem:[%s1 + $0x98] sm:$0xff]
      %v502 = vld [vmem:[%s1 + $0xa0] sm:$0xff]
      %v503 = vld [vmem:[%s1 + $0xa8] sm:$0xff]
      %v504 = vld [vmem:[%s1 + $0xb0] sm:$0xff]
      %v505 = vld [vmem:[%s1 + $0xb8] sm:$0xff]
      %v506 = vld [vmem:[%s1 + $0xc0] sm:$0xff]
      %v507 = vld [vmem:[%s1 + $0xc8] sm:$0xff]
      %v508 = vld [vmem:[%s1 + $0xd0] sm:$0xff]
      %v509 = vld [vmem:[%s1 + $0xd8] sm:$0xff]
      %v510 = vld [vmem:[%s1 + $0xe0] sm:$0xff]
      %v511 = vld [vmem:[%s1 + $0xe8] sm:$0xff]
      %v512 = vld [vmem:[%s1 + $0xf0] sm:$0xff]
      %v513 = vld [vmem:[%s1 + $0xf8] sm:$0xff]
      %v514 = vld [vmem:[%s1 + $0x100] sm:$0xff]
      %v515 = vld [vmem:[%s1 + $0x108] sm:$0xff]
      %v516 = vld [vmem:[%s1 + $0x110] sm:$0xff]
      %v517 = vld [vmem:[%s1 + $0x118] sm:$0xff]
      %v518 = vld [vmem:[%s1 + $0x120] sm:$0xff]
      %v519 = vld [vmem:[%s1 + $0x128] sm:$0xff]
      %v520 = vld [vmem:[%s1 + $0x130] sm:$0xff]
      %v521 = vld [vmem:[%s1 + $0x138] sm:$0xff]
      %v522 = vld [vmem:[%s1 + $0x140] sm:$0xff]
      %v523 = vld [vmem:[%s1 + $0x148] sm:$0xff]
      %v524 = vld [vmem:[%s1 + $0x150] sm:$0xff]
      %v525 = vld [vmem:[%s1 + $0x158] sm:$0xff]
      %v526 = vld [vmem:[%s1 + $0x160] sm:$0xff]
      %v527 = vld [vmem:[%s1 + $0x168] sm:$0xff]
      %v528 = vld [vmem:[%s1 + $0x170] sm:$0xff]
      %v529 = vld [vmem:[%s1 + $0x178] sm:$0xff]
      %v530 = vld [vmem:[%s1 + $0x180] sm:$0xff]
      %v531 = vld [vmem:[%s1 + $0x188] sm:$0xff]
      %v532 = vld [vmem:[%s1 + $0x190] sm:$0xff]
      %v533 = vld [vmem:[%s1 + $0x198] sm:$0xff]
      %v534 = vld [vmem:[%s1 + $0x1a0] sm:$0xff]
      %v535 = vld [vmem:[%s1 + $0x1a8] sm:$0xff]
      %v536 = vld [vmem:[%s1 + $0x1b0] sm:$0xff]
      %v537 = vld [vmem:[%s1 + $0x1b8] sm:$0xff]
      %v538 = vld [vmem:[%s1 + $0x1c0] sm:$0xff]
      %v539 = vld [vmem:[%s1 + $0x1c8] sm:$0xff]
      %v540 = vld [vmem:[%s1 + $0x1d0] sm:$0xff]
      %v541 = vld [vmem:[%s1 + $0x1d8] sm:$0xff]
      %v542 = vld [vmem:[%s1 + $0x1e0] sm:$0xff]
      %v543 = vld [vmem:[%s1 + $0x1e8] sm:$0xff]
      %v544 = vld [vmem:[%s1 + $0x1f0] sm:$0xff]
      %v545 = vld [vmem:[%s1 + $0x1f8] sm:$0xff]
      %v546 = vld [vmem:[%s1 + $0x200] sm:$0xff]
      %v547 = vld [vmem:[%s1 + $0x208] sm:$0xff]
      %v548 = vld [vmem:[%s1 + $0x210] sm:$0xff]
      %v549 = vld [vmem:[%s1 + $0x218] sm:$0xff]
      %v550 = vld [vmem:[%s1 + $0x220] sm:$0xff]
      %v551 = vld [vmem:[%s1 + $0x228] sm:$0xff]
      %v552 = vld [vmem:[%s1 + $0x230] sm:$0xff]
      %v553 = vld [vmem:[%s1 + $0x238] sm:$0xff]
      %v554 = vld [vmem:[%s1 + $0x240] sm:$0xff]
      %v555 = vld [vmem:[%s1 + $0x248] sm:$0xff]
      %v556 = vld [vmem:[%s1 + $0x250] sm:$0xff]
      %v557 = vld [vmem:[%s1 + $0x258] sm:$0xff]
      %v558 = vld [vmem:[%s1 + $0x260] sm:$0xff]
      %v559 = vld [vmem:[%s1 + $0x268] sm:$0xff]
      %v560 = vld [vmem:[%s1 + $0x270] sm:$0xff]
      %v561 = vld [vmem:[%s1 + $0x278] sm:$0xff]
      %v562 = vld [vmem:[%s1 + $0x280] sm:$0xff]
      %v563 = vld [vmem:[%s1 + $0x288] sm:$0xff]
      %v564 = vld [vmem:[%s1 + $0x290] sm:$0xff]
      %v565 = vld [vmem:[%s1 + $0x298] sm:$0xff]
      %v566 = vld [vmem:[%s1 + $0x2a0] sm:$0xff]
      %v567 = vld [vmem:[%s1 + $0x2a8] sm:$0xff]
      %v568 = vld [vmem:[%s1 + $0x2b0] sm:$0xff]
      %v569 = vld [vmem:[%s1 + $0x2b8] sm:$0xff]
      %v570 = vld [vmem:[%s1 + $0x2c0] sm:$0xff]
      %v571 = vld [vmem:[%s1 + $0x2c8] sm:$0xff]
      %v572 = vld [vmem:[%s1 + $0x2d0] sm:$0xff]
      %v573 = vld [vmem:[%s1 + $0x2d8] sm:$0xff]
      %v574 = vld [vmem:[%s1 + $0x2e0] sm:$0xff]
      %v575 = vld [vmem:[%s1 + $0x2e8] sm:$0xff]
      %v576 = vld [vmem:[%s1 + $0x2f0] sm:$0xff]
      %v577 = vld [vmem:[%s1 + $0x2f8] sm:$0xff]
      %v578 = vld [vmem:[%s1 + $0x300] sm:$0xff]
      %v579 = vld [vmem:[%s1 + $0x308] sm:$0xff]
      %v580 = vld [vmem:[%s1 + $0x310] sm:$0xff]
      %v581 = vld [vmem:[%s1 + $0x318] sm:$0xff]
      %v582 = vld [vmem:[%s1 + $0x320] sm:$0xff]
      %v583 = vld [vmem:[%s1 + $0x328] sm:$0xff]
      %v584 = vld [vmem:[%s1 + $0x330] sm:$0xff]
      %v585 = vld [vmem:[%s1 + $0x338] sm:$0xff]
      %v586 = vld [vmem:[%s1 + $0x340] sm:$0xff]
      %v587 = vld [vmem:[%s1 + $0x348] sm:$0xff]
      %v588 = vld [vmem:[%s1 + $0x350] sm:$0xff]
      %v589 = vld [vmem:[%s1 + $0x358] sm:$0xff]
      %v590 = vld [vmem:[%s1 + $0x360] sm:$0xff]
      %v591 = vld [vmem:[%s1 + $0x368] sm:$0xff]
      %v592 = vld [vmem:[%s1 + $0x370] sm:$0xff]
      %v593 = vld [vmem:[%s1 + $0x378] sm:$0xff]
      %v594 = vld [vmem:[%s1 + $0x380] sm:$0xff]
      %v595 = vld [vmem:[%s1 + $0x388] sm:$0xff]
      %v596 = vld [vmem:[%s1 + $0x390] sm:$0xff]
      %v597 = vld [vmem:[%s1 + $0x398] sm:$0xff]
      %v598 = vld [vmem:[%s1 + $0x3a0] sm:$0xff]
      %v599 = vld [vmem:[%s1 + $0x3a8] sm:$0xff]
      %v600 = vld [vmem:[%s1 + $0x3b0] sm:$0xff]
      %v601 = vld [vmem:[%s1 + $0x3b8] sm:$0xff]
      %v602 = vld [vmem:[%s1 + $0x3c0] sm:$0xff]
      %v603 = vld [vmem:[%s1 + $0x3c8] sm:$0xff]
      %v604 = vld [vmem:[%s1 + $0x3d0] sm:$0xff]
      %v605 = vld [vmem:[%s1 + $0x3d8] sm:$0xff]
      %v606 = vld [vmem:[%s1 + $0x3e0] sm:$0xff]
      %v607 = vld [vmem:[%s1 + $0x3e8] sm:$0xff]
      %v608 = vld [vmem:[%s1 + $0x3f0] sm:$0xff]
      %v609 = vld [vmem:[%s1 + $0x3f8] sm:$0xff]
      %v610 = vld [vmem:[%s1 + $0x400] sm:$0xff]
      %v611 = vld [vmem:[%s1 + $0x408] sm:$0xff]
      %v612 = vld [vmem:[%s1 + $0x410] sm:$0xff]
      %v613 = vld [vmem:[%s1 + $0x418] sm:$0xff]
      %v614 = vld [vmem:[%s1 + $0x420] sm:$0xff]
      %v615 = vld [vmem:[%s1 + $0x428] sm:$0xff]
      %v616 = vld [vmem:[%s1 + $0x430] sm:$0xff]
      %v617 = vld [vmem:[%s1 + $0x438] sm:$0xff]
      %v618 = vld [vmem:[%s1 + $0x440] sm:$0xff]
      %v619 = vld [vmem:[%s1 + $0x448] sm:$0xff]
      %v620 = vld [vmem:[%s1 + $0x450] sm:$0xff]
      %v621 = vld [vmem:[%s1 + $0x458] sm:$0xff]
      %v622 = vld [vmem:[%s1 + $0x460] sm:$0xff]
      %v623 = vld [vmem:[%s1 + $0x468] sm:$0xff]
      %v624 = vld [vmem:[%s1 + $0x470] sm:$0xff]
      %v625 = vld [vmem:[%s1 + $0x478] sm:$0xff]
      %626 = vmatprep.subr.mxu0 0.0
      %627 = vmatpush1.msra.mxu0 %v482
      %628 = vmatprep.subr.mxu0 0.0
      %629 = vmatpush1.msra.mxu0 %v483
      %630 = vmatprep.subr.mxu0 0.0
      %631 = vmatpush1.msra.mxu0 %v484
      %632 = vmatprep.subr.mxu0 0.0
      %633 = vmatpush1.msra.mxu0 %v485
      %634 = vmatprep.subr.mxu0 0.0
      %635 = vmatpush1.msra.mxu0 %v486
      %636 = vmatprep.subr.mxu0 0.0
      %637 = vmatpush1.msra.mxu0 %v487
      %638 = vmatprep.subr.mxu0 0.0
      %639 = vmatpush1.msra.mxu0 %v488
      %640 = vmatprep.subr.mxu0 0.0
      %641 = vmatpush1.msra.mxu0 %v489
      %642 = vmatprep.subr.mxu0 0.0
      %643 = vmatpush1.msra.mxu0 %v490
      %644 = vmatprep.subr.mxu0 0.0
      %645 = vmatpush1.msra.mxu0 %v491
      %646 = vmatprep.subr.mxu0 0.0
      %647 = vmatpush1.msra.mxu0 %v492
      %648 = vmatprep.subr.mxu0 0.0
      %649 = vmatpush1.msra.mxu0 %v493
      %650 = vmatprep.subr.mxu0 0.0
      %651 = vmatpush1.msra.mxu0 %v494
      %652 = vmatprep.subr.mxu0 0.0
      %653 = vmatpush1.msra.mxu0 %v495
      %654 = vmatprep.subr.mxu0 0.0
      %655 = vmatpush1.msra.mxu0 %v496
      %656 = vmatprep.subr.mxu0 0.0
      %657 = vmatpush1.msra.mxu0 %v497
      %658 = vmatprep.subr.mxu0 0.0
      %659 = vmatpush1.msra.mxu0 %v498
      %660 = vmatprep.subr.mxu0 0.0
      %661 = vmatpush1.msra.mxu0 %v499
      %662 = vmatprep.subr.mxu0 0.0
      %663 = vmatpush1.msra.mxu0 %v500
      %664 = vmatprep.subr.mxu0 0.0
      %665 = vmatpush1.msra.mxu0 %v501
      %666 = vmatprep.subr.mxu0 0.0
      %667 = vmatpush1.msra.mxu0 %v502
      %668 = vmatprep.subr.mxu0 0.0
      %669 = vmatpush1.msra.mxu0 %v503
      %670 = vmatprep.subr.mxu0 0.0
      %671 = vmatpush1.msra.mxu0 %v504
      %672 = vmatprep.subr.mxu0 0.0
      %673 = vmatpush1.msra.mxu0 %v505
      %674 = vmatprep.subr.mxu0 0.0
      %675 = vmatpush1.msra.mxu0 %v506
      %676 = vmatprep.subr.mxu0 0.0
      %677 = vmatpush1.msra.mxu0 %v507
      %678 = vmatprep.subr.mxu0 0.0
      %679 = vmatpush1.msra.mxu0 %v508
      %680 = vmatprep.subr.mxu0 0.0
      %681 = vmatpush1.msra.mxu0 %v509
      %682 = vmatprep.subr.mxu0 0.0
      %683 = vmatpush1.msra.mxu0 %v510
      %684 = vmatprep.subr.mxu0 0.0
      %685 = vmatpush1.msra.mxu0 %v511
      %686 = vmatprep.subr.mxu0 0.0
      %687 = vmatpush1.msra.mxu0 %v512
      %688 = vmatprep.subr.mxu0 0.0
      %689 = vmatpush1.msra.mxu0 %v513
      %690 = vmatprep.mubr.f32.mxu0 %v447
      %691 = vmatmul.mubr.f32.gmra.mrb[0].mxu0 %v446
      %v692 = vpop.f32.mrb[0].mxu0
      %v693 = vadd.f32 0.0, %v692
      %v694 = vpop.f32.mrb[0].mxu0
      %695 = vmatprep.mubr.f32.mxu0 %v456
      %696 = vmatmul.mubr.f32.gmra.mrb[0].mxu0 %v455
      %v697 = vpop.f32.mrb[0].mxu0
      %v698 = vadd.f32 0.0, %v697
      %v699 = vpop.f32.mrb[0].mxu0
      %700 = vmatprep.mubr.f32.mxu0 %v465
      %701 = vmatmul.mubr.f32.gmra.mrb[0].mxu0 %v464
      %v702 = vpop.f32.mrb[0].mxu0
      %v703 = vadd.f32 0.0, %v702
      %v704 = vpop.f32.mrb[0].mxu0
      %705 = vmatprep.mubr.f32.mxu0 %v474
      %706 = vmatmul.mubr.f32.gmra.mrb[0].mxu0 %v473
      %v707 = vpop.f32.mrb[0].mxu0
      %v708 = vadd.f32 0.0, %v707
      %v709 = vpop.f32.mrb[0].mxu0
      %710 = vdwg.mxu0
      %711 = vmatprep.subr.mxu0 0.0
      %712 = vmatpush1.msra.mxu0 %v514
      %713 = vmatprep.subr.mxu0 0.0
      %714 = vmatpush1.msra.mxu0 %v515
      %715 = vmatprep.subr.mxu0 0.0
      %716 = vmatpush1.msra.mxu0 %v516
      %717 = vmatprep.subr.mxu0 0.0
      %718 = vmatpush1.msra.mxu0 %v517
      %719 = vmatprep.subr.mxu0 0.0
      %720 = vmatpush1.msra.mxu0 %v518
      %721 = vmatprep.subr.mxu0 0.0
      %722 = vmatpush1.msra.mxu0 %v519
      %723 = vmatprep.subr.mxu0 0.0
      %724 = vmatpush1.msra.mxu0 %v520
      %725 = vmatprep.subr.mxu0 0.0
      %726 = vmatpush1.msra.mxu0 %v521
      %727 = vmatprep.subr.mxu0 0.0
      %728 = vmatpush1.msra.mxu0 %v522
      %729 = vmatprep.subr.mxu0 0.0
      %730 = vmatpush1.msra.mxu0 %v523
      %731 = vmatprep.subr.mxu0 0.0
      %732 = vmatpush1.msra.mxu0 %v524
      %733 = vmatprep.subr.mxu0 0.0
      %734 = vmatpush1.msra.mxu0 %v525
      %735 = vmatprep.subr.mxu0 0.0
      %736 = vmatpush1.msra.mxu0 %v526
      %737 = vmatprep.subr.mxu0 0.0
      %738 = vmatpush1.msra.mxu0 %v527
      %739 = vmatprep.subr.mxu0 0.0
      %740 = vmatpush1.msra.mxu0 %v528
      %741 = vmatprep.subr.mxu0 0.0
      %742 = vmatpush1.msra.mxu0 %v529
      %743 = vmatprep.subr.mxu0 0.0
      %744 = vmatpush1.msra.mxu0 %v530
      %745 = vmatprep.subr.mxu0 0.0
      %746 = vmatpush1.msra.mxu0 %v531
      %747 = vmatprep.subr.mxu0 0.0
      %748 = vmatpush1.msra.mxu0 %v532
      %749 = vmatprep.subr.mxu0 0.0
      %750 = vmatpush1.msra.mxu0 %v533
      %751 = vmatprep.subr.mxu0 0.0
      %752 = vmatpush1.msra.mxu0 %v534
      %753 = vmatprep.subr.mxu0 0.0
      %754 = vmatpush1.msra.mxu0 %v535
      %755 = vmatprep.subr.mxu0 0.0
      %756 = vmatpush1.msra.mxu0 %v536
      %757 = vmatprep.subr.mxu0 0.0
      %758 = vmatpush1.msra.mxu0 %v537
      %759 = vmatprep.subr.mxu0 0.0
      %760 = vmatpush1.msra.mxu0 %v538
      %761 = vmatprep.subr.mxu0 0.0
      %762 = vmatpush1.msra.mxu0 %v539
      %763 = vmatprep.subr.mxu0 0.0
      %764 = vmatpush1.msra.mxu0 %v540
      %765 = vmatprep.subr.mxu0 0.0
      %766 = vmatpush1.msra.mxu0 %v541
      %767 = vmatprep.subr.mxu0 0.0
      %768 = vmatpush1.msra.mxu0 %v542
      %769 = vmatprep.subr.mxu0 0.0
      %770 = vmatpush1.msra.mxu0 %v543
      %771 = vmatprep.subr.mxu0 0.0
      %772 = vmatpush1.msra.mxu0 %v544
      %773 = vmatprep.subr.mxu0 0.0
      %774 = vmatpush1.msra.mxu0 %v545
      %775 = vmatprep.mubr.f32.mxu0 %v449
      %776 = vmatmul.mubr.f32.gmra.mrb[0].mxu0 %v448
      %v777 = vpop.f32.mrb[0].mxu0
      %v778 = vadd.f32 %v693, %v777
      %v779 = vpop.f32.mrb[0].mxu0
      %780 = vmatprep.mubr.f32.mxu0 %v458
      %781 = vmatmul.mubr.f32.gmra.mrb[0].mxu0 %v457
      %v782 = vpop.f32.mrb[0].mxu0
      %v783 = vadd.f32 %v698, %v782
      %v784 = vpop.f32.mrb[0].mxu0
      %785 = vmatprep.mubr.f32.mxu0 %v467
      %786 = vmatmul.mubr.f32.gmra.mrb[0].mxu0 %v466
      %v787 = vpop.f32.mrb[0].mxu0
      %v788 = vadd.f32 %v703, %v787
      %v789 = vpop.f32.mrb[0].mxu0
      %790 = vmatprep.mubr.f32.mxu0 %v476
      %791 = vmatmul.mubr.f32.gmra.mrb[0].mxu0 %v475
      %v792 = vpop.f32.mrb[0].mxu0
      %v793 = vadd.f32 %v708, %v792
      %v794 = vpop.f32.mrb[0].mxu0
      %795 = vdwg.mxu0
      %796 = vmatprep.subr.mxu0 0.0
      %797 = vmatpush1.msra.mxu0 %v546
      %798 = vmatprep.subr.mxu0 0.0
      %799 = vmatpush1.msra.mxu0 %v547
      %800 = vmatprep.subr.mxu0 0.0
      %801 = vmatpush1.msra.mxu0 %v548
      %802 = vmatprep.subr.mxu0 0.0
      %803 = vmatpush1.msra.mxu0 %v549
      %804 = vmatprep.subr.mxu0 0.0
      %805 = vmatpush1.msra.mxu0 %v550
      %806 = vmatprep.subr.mxu0 0.0
      %807 = vmatpush1.msra.mxu0 %v551
      %808 = vmatprep.subr.mxu0 0.0
      %809 = vmatpush1.msra.mxu0 %v552
      %810 = vmatprep.subr.mxu0 0.0
      %811 = vmatpush1.msra.mxu0 %v553
      %812 = vmatprep.subr.mxu0 0.0
      %813 = vmatpush1.msra.mxu0 %v554
      %814 = vmatprep.subr.mxu0 0.0
      %815 = vmatpush1.msra.mxu0 %v555
      %816 = vmatprep.subr.mxu0 0.0
      %817 = vmatpush1.msra.mxu0 %v556
      %818 = vmatprep.subr.mxu0 0.0
      %819 = vmatpush1.msra.mxu0 %v557
      %820 = vmatprep.subr.mxu0 0.0
      %821 = vmatpush1.msra.mxu0 %v558
      %822 = vmatprep.subr.mxu0 0.0
      %823 = vmatpush1.msra.mxu0 %v559
      %824 = vmatprep.subr.mxu0 0.0
      %825 = vmatpush1.msra.mxu0 %v560
      %826 = vmatprep.subr.mxu0 0.0
      %827 = vmatpush1.msra.mxu0 %v561
      %828 = vmatprep.subr.mxu0 0.0
      %829 = vmatpush1.msra.mxu0 %v562
      %830 = vmatprep.subr.mxu0 0.0
      %831 = vmatpush1.msra.mxu0 %v563
      %832 = vmatprep.subr.mxu0 0.0
      %833 = vmatpush1.msra.mxu0 %v564
      %834 = vmatprep.subr.mxu0 0.0
      %835 = vmatpush1.msra.mxu0 %v565
      %836 = vmatprep.subr.mxu0 0.0
      %837 = vmatpush1.msra.mxu0 %v566
      %838 = vmatprep.subr.mxu0 0.0
      %839 = vmatpush1.msra.mxu0 %v567
      %840 = vmatprep.subr.mxu0 0.0
      %841 = vmatpush1.msra.mxu0 %v568
      %842 = vmatprep.subr.mxu0 0.0
      %843 = vmatpush1.msra.mxu0 %v569
      %844 = vmatprep.subr.mxu0 0.0
      %845 = vmatpush1.msra.mxu0 %v570
      %846 = vmatprep.subr.mxu0 0.0
      %847 = vmatpush1.msra.mxu0 %v571
      %848 = vmatprep.subr.mxu0 0.0
      %849 = vmatpush1.msra.mxu0 %v572
      %850 = vmatprep.subr.mxu0 0.0
      %851 = vmatpush1.msra.mxu0 %v573
      %852 = vmatprep.subr.mxu0 0.0
      %853 = vmatpush1.msra.mxu0 %v574
      %854 = vmatprep.subr.mxu0 0.0
      %855 = vmatpush1.msra.mxu0 %v575
      %856 = vmatprep.subr.mxu0 0.0
      %857 = vmatpush1.msra.mxu0 %v576
      %858 = vmatprep.subr.mxu0 0.0
      %859 = vmatpush1.msra.mxu0 %v577
      %860 = vmatprep.mubr.f32.mxu0 %v451
      %861 = vmatmul.mubr.f32.gmra.mrb[0].mxu0 %v450
      %v862 = vpop.f32.mrb[0].mxu0
      %v863 = vadd.f32 %v778, %v862
      %v864 = vpop.f32.mrb[0].mxu0
      %865 = vmatprep.mubr.f32.mxu0 %v460
      %866 = vmatmul.mubr.f32.gmra.mrb[0].mxu0 %v459
      %v867 = vpop.f32.mrb[0].mxu0
      %v868 = vadd.f32 %v783, %v867
      %v869 = vpop.f32.mrb[0].mxu0
      %870 = vmatprep.mubr.f32.mxu0 %v469
      %871 = vmatmul.mubr.f32.gmra.mrb[0].mxu0 %v468
      %v872 = vpop.f32.mrb[0].mxu0
      %v873 = vadd.f32 %v788, %v872
      %v874 = vpop.f32.mrb[0].mxu0
      %875 = vmatprep.mubr.f32.mxu0 %v478
      %876 = vmatmul.mubr.f32.gmra.mrb[0].mxu0 %v477
      %v877 = vpop.f32.mrb[0].mxu0
      %v878 = vadd.f32 %v793, %v877
      %v879 = vpop.f32.mrb[0].mxu0
      %880 = vdwg.mxu0
      %881 = vmatprep.subr.mxu0 0.0
      %882 = vmatpush1.msra.mxu0 %v578
      %883 = vmatprep.subr.mxu0 0.0
      %884 = vmatpush1.msra.mxu0 %v579
      %885 = vmatprep.subr.mxu0 0.0
      %886 = vmatpush1.msra.mxu0 %v580
      %887 = vmatprep.subr.mxu0 0.0
      %888 = vmatpush1.msra.mxu0 %v581
      %889 = vmatprep.subr.mxu0 0.0
      %890 = vmatpush1.msra.mxu0 %v582
      %891 = vmatprep.subr.mxu0 0.0
      %892 = vmatpush1.msra.mxu0 %v583
      %893 = vmatprep.subr.mxu0 0.0
      %894 = vmatpush1.msra.mxu0 %v584
      %895 = vmatprep.subr.mxu0 0.0
      %896 = vmatpush1.msra.mxu0 %v585
      %897 = vmatprep.subr.mxu0 0.0
      %898 = vmatpush1.msra.mxu0 %v586
      %899 = vmatprep.subr.mxu0 0.0
      %900 = vmatpush1.msra.mxu0 %v587
      %901 = vmatprep.subr.mxu0 0.0
      %902 = vmatpush1.msra.mxu0 %v588
      %903 = vmatprep.subr.mxu0 0.0
      %904 = vmatpush1.msra.mxu0 %v589
      %905 = vmatprep.subr.mxu0 0.0
      %906 = vmatpush1.msra.mxu0 %v590
      %907 = vmatprep.subr.mxu0 0.0
      %908 = vmatpush1.msra.mxu0 %v591
      %909 = vmatprep.subr.mxu0 0.0
      %910 = vmatpush1.msra.mxu0 %v592
      %911 = vmatprep.subr.mxu0 0.0
      %912 = vmatpush1.msra.mxu0 %v593
      %913 = vmatprep.subr.mxu0 0.0
      %914 = vmatpush1.msra.mxu0 %v594
      %915 = vmatprep.subr.mxu0 0.0
      %916 = vmatpush1.msra.mxu0 %v595
      %917 = vmatprep.subr.mxu0 0.0
      %918 = vmatpush1.msra.mxu0 %v596
      %919 = vmatprep.subr.mxu0 0.0
      %920 = vmatpush1.msra.mxu0 %v597
      %921 = vmatprep.subr.mxu0 0.0
      %922 = vmatpush1.msra.mxu0 %v598
      %923 = vmatprep.subr.mxu0 0.0
      %924 = vmatpush1.msra.mxu0 %v599
      %925 = vmatprep.subr.mxu0 0.0
      %926 = vmatpush1.msra.mxu0 %v600
      %927 = vmatprep.subr.mxu0 0.0
      %928 = vmatpush1.msra.mxu0 %v601
      %929 = vmatprep.subr.mxu0 0.0
      %930 = vmatpush1.msra.mxu0 %v602
      %931 = vmatprep.subr.mxu0 0.0
      %932 = vmatpush1.msra.mxu0 %v603
      %933 = vmatprep.subr.mxu0 0.0
      %934 = vmatpush1.msra.mxu0 %v604
      %935 = vmatprep.subr.mxu0 0.0
      %936 = vmatpush1.msra.mxu0 %v605
      %937 = vmatprep.subr.mxu0 0.0
      %938 = vmatpush1.msra.mxu0 %v606
      %939 = vmatprep.subr.mxu0 0.0
      %940 = vmatpush1.msra.mxu0 %v607
      %941 = vmatprep.subr.mxu0 0.0
      %942 = vmatpush1.msra.mxu0 %v608
      %943 = vmatprep.subr.mxu0 0.0
      %944 = vmatpush1.msra.mxu0 %v609
      %945 = vmatprep.mubr.f32.mxu0 %v453
      %946 = vmatmul.mubr.f32.gmra.mrb[0].mxu0 %v452
      %v947 = vpop.f32.mrb[0].mxu0
      %v948 = vadd.f32 %v863, %v947
      %v949 = vpop.f32.mrb[0].mxu0
      %950 = vmatprep.mubr.f32.mxu0 %v462
      %951 = vmatmul.mubr.f32.gmra.mrb[0].mxu0 %v461
      %v952 = vpop.f32.mrb[0].mxu0
      %v953 = vadd.f32 %v868, %v952
      %v954 = vpop.f32.mrb[0].mxu0
      %955 = vmatprep.mubr.f32.mxu0 %v471
      %956 = vmatmul.mubr.f32.gmra.mrb[0].mxu0 %v470
      %v957 = vpop.f32.mrb[0].mxu0
      %v958 = vadd.f32 %v873, %v957
      %v959 = vpop.f32.mrb[0].mxu0
      %960 = vmatprep.mubr.f32.mxu0 %v480
      %961 = vmatmul.mubr.f32.gmra.mrb[0].mxu0 %v479
      %v962 = vpop.f32.mrb[0].mxu0
      %v963 = vadd.f32 %v878, %v962
      %v964 = vpop.f32.mrb[0].mxu0
      %965 = vdwg.mxu0
      %966 = vmatprep.subr.mxu0 0.0
      %967 = vmatpush1.msra.mxu0 %v610
      %968 = vmatprep.subr.mxu0 0.0
      %969 = vmatpush1.msra.mxu0 %v611
      %970 = vmatprep.subr.mxu0 0.0
      %971 = vmatpush1.msra.mxu0 %v612
      %972 = vmatprep.subr.mxu0 0.0
      %973 = vmatpush1.msra.mxu0 %v613
      %974 = vmatprep.subr.mxu0 0.0
      %975 = vmatpush1.msra.mxu0 %v614
      %976 = vmatprep.subr.mxu0 0.0
      %977 = vmatpush1.msra.mxu0 %v615
      %978 = vmatprep.subr.mxu0 0.0
      %979 = vmatpush1.msra.mxu0 %v616
      %980 = vmatprep.subr.mxu0 0.0
      %981 = vmatpush1.msra.mxu0 %v617
      %982 = vmatprep.subr.mxu0 0.0
      %983 = vmatpush1.msra.mxu0 %v618
      %984 = vmatprep.subr.mxu0 0.0
      %985 = vmatpush1.msra.mxu0 %v619
      %986 = vmatprep.subr.mxu0 0.0
      %987 = vmatpush1.msra.mxu0 %v620
      %988 = vmatprep.subr.mxu0 0.0
      %989 = vmatpush1.msra.mxu0 %v621
      %990 = vmatprep.subr.mxu0 0.0
      %991 = vmatpush1.msra.mxu0 %v622
      %992 = vmatprep.subr.mxu0 0.0
      %993 = vmatpush1.msra.mxu0 %v623
      %994 = vmatprep.subr.mxu0 0.0
      %995 = vmatpush1.msra.mxu0 %v624
      %996 = vmatprep.subr.mxu0 0.0
      %997 = vmatpush1.msra.mxu0 %v625
      %998 = vmatprep.subr.mxu0 0.0
      %999 = vmatpush1.msra.mxu0 0.0
      %1000 = vmatprep.subr.mxu0 0.0
      %1001 = vmatpush1.msra.mxu0 0.0
      %1002 = vmatprep.subr.mxu0 0.0
      %1003 = vmatpush1.msra.mxu0 0.0
      %1004 = vmatprep.subr.mxu0 0.0
      %1005 = vmatpush1.msra.mxu0 0.0
      %1006 = vmatprep.subr.mxu0 0.0
      %1007 = vmatpush1.msra.mxu0 0.0
      %1008 = vmatprep.subr.mxu0 0.0
      %1009 = vmatpush1.msra.mxu0 0.0
      %1010 = vmatprep.subr.mxu0 0.0
      %1011 = vmatpush1.msra.mxu0 0.0
      %1012 = vmatprep.subr.mxu0 0.0
      %1013 = vmatpush1.msra.mxu0 0.0
      %1014 = vmatprep.subr.mxu0 0.0
      %1015 = vmatpush1.msra.mxu0 0.0
      %1016 = vmatprep.subr.mxu0 0.0
      %1017 = vmatpush1.msra.mxu0 0.0
      %1018 = vmatprep.subr.mxu0 0.0
      %1019 = vmatpush1.msra.mxu0 0.0
      %1020 = vmatprep.subr.mxu0 0.0
      %1021 = vmatpush1.msra.mxu0 0.0
      %1022 = vmatprep.subr.mxu0 0.0
      %1023 = vmatpush1.msra.mxu0 0.0
      %1024 = vmatprep.subr.mxu0 0.0
      %1025 = vmatpush1.msra.mxu0 0.0
      %1026 = vmatprep.subr.mxu0 0.0
      %1027 = vmatpush1.msra.mxu0 0.0
      %1028 = vmatprep.subr.mxu0 0.0
      %1029 = vmatpush1.msra.mxu0 0.0
      %1030 = vmatprep.mubr.f32.mxu0 0.0
      %1031 = vmatmul.mubr.f32.gmra.mrb[0].mxu0 %v454
      %v1032 = vpop.f32.mrb[0].mxu0
      %v1033 = vadd.f32 %v948, %v1032
      %v1034 = vpop.f32.mrb[0].mxu0
      %1035 = vmatprep.mubr.f32.mxu0 0.0
      %1036 = vmatmul.mubr.f32.gmra.mrb[0].mxu0 %v463
      %v1037 = vpop.f32.mrb[0].mxu0
      %v1038 = vadd.f32 %v953, %v1037
      %v1039 = vpop.f32.mrb[0].mxu0
      %1040 = vmatprep.mubr.f32.mxu0 0.0
      %1041 = vmatmul.mubr.f32.gmra.mrb[0].mxu0 %v472
      %v1042 = vpop.f32.mrb[0].mxu0
      %v1043 = vadd.f32 %v958, %v1042
      %v1044 = vpop.f32.mrb[0].mxu0
      %1045 = vmatprep.mubr.f32.mxu0 0.0
      %1046 = vmatmul.mubr.f32.gmra.mrb[0].mxu0 %v481
      %v1047 = vpop.f32.mrb[0].mxu0
      %v1048 = vadd.f32 %v963, %v1047
      %v1049 = vpop.f32.mrb[0].mxu0
      %1050 = vdwg.mxu0
      %v1051 = vld [vmem:[%s2] sm:$0x1]
      %v1053 = vlaneseq
      %v1054 = vshrl.u32 %v1053, 7
      %v1055 = vsub.s32 0, %v1054
      %v1056 = vrot.slane %v1051, %v1055
      %v1058 = vmul.f32 %v1033, %v1056
      %v1059 = vmul.f32 %v1038, %v1056
      %v1060 = vmul.f32 %v1043, %v1056
      %v1061 = vmul.f32 %v1048, %v1056
      %v1062 = vld [vmem:[%s3] sm:$0x1]
      %v1064 = vlaneseq
      %v1065 = vshrl.u32 %v1064, 7
      %v1066 = vsub.s32 0, %v1065
      %v1067 = vrot.slane %v1062, %v1066
      %v1069 = vadd.f32 %v1058, %v1067
      %v1070 = vadd.f32 %v1059, %v1067
      %v1071 = vadd.f32 %v1060, %v1067
      %v1072 = vadd.f32 %v1061, %v1067
      %v1073 = vld [vmem:[%s353] sm:$0xff]
      %v1074 = vld [vmem:[%s353 + $0x8] sm:$0xff]
      %v1075 = vld [vmem:[%s353 + $0x10] sm:$0xff]
      %v1076 = vld [vmem:[%s353 + $0x18] sm:$0xff]
      %v1077 = vld [vmem:[%s5] sm:$0xff]
      %v1078 = vld [vmem:[%s5 + $0x8] sm:$0xff]
      %v1079 = vld [vmem:[%s5 + $0x10] sm:$0xff]
      %v1080 = vld [vmem:[%s5 + $0x18] sm:$0xff]
      %v1081 = vld [vmem:[%s5 + $0x20] sm:$0xff]
      %v1082 = vld [vmem:[%s5 + $0x28] sm:$0xff]
      %v1083 = vld [vmem:[%s5 + $0x30] sm:$0xff]
      %v1084 = vld [vmem:[%s5 + $0x38] sm:$0xff]
      %v1085 = vld [vmem:[%s5 + $0x40] sm:$0xff]
      %v1086 = vld [vmem:[%s5 + $0x48] sm:$0xff]
      %v1087 = vld [vmem:[%s5 + $0x50] sm:$0xff]
      %v1088 = vld [vmem:[%s5 + $0x58] sm:$0xff]
      %v1089 = vld [vmem:[%s5 + $0x60] sm:$0xff]
      %v1090 = vld [vmem:[%s5 + $0x68] sm:$0xff]
      %v1091 = vld [vmem:[%s5 + $0x70] sm:$0xff]
      %v1092 = vld [vmem:[%s5 + $0x78] sm:$0xff]
      %1093 = vmatprep.subr.mxu0 0.0
      %1094 = vmatpush1.msra.mxu0 %v1077
      %1095 = vmatprep.subr.mxu0 0.0
      %1096 = vmatpush1.msra.mxu0 %v1078
      %1097 = vmatprep.subr.mxu0 0.0
      %1098 = vmatpush1.msra.mxu0 %v1079
      %1099 = vmatprep.subr.mxu0 0.0
      %1100 = vmatpush1.msra.mxu0 %v1080
      %1101 = vmatprep.subr.mxu0 0.0
      %1102 = vmatpush1.msra.mxu0 %v1081
      %1103 = vmatprep.subr.mxu0 0.0
      %1104 = vmatpush1.msra.mxu0 %v1082
      %1105 = vmatprep.subr.mxu0 0.0
      %1106 = vmatpush1.msra.mxu0 %v1083
      %1107 = vmatprep.subr.mxu0 0.0
      %1108 = vmatpush1.msra.mxu0 %v1084
      %1109 = vmatprep.subr.mxu0 0.0
      %1110 = vmatpush1.msra.mxu0 %v1085
      %1111 = vmatprep.subr.mxu0 0.0
      %1112 = vmatpush1.msra.mxu0 %v1086
      %1113 = vmatprep.subr.mxu0 0.0
      %1114 = vmatpush1.msra.mxu0 %v1087
      %1115 = vmatprep.subr.mxu0 0.0
      %1116 = vmatpush1.msra.mxu0 %v1088
      %1117 = vmatprep.subr.mxu0 0.0
      %1118 = vmatpush1.msra.mxu0 %v1089
      %1119 = vmatprep.subr.mxu0 0.0
      %1120 = vmatpush1.msra.mxu0 %v1090
      %1121 = vmatprep.subr.mxu0 0.0
      %1122 = vmatpush1.msra.mxu0 %v1091
      %1123 = vmatprep.subr.mxu0 0.0
      %1124 = vmatpush1.msra.mxu0 %v1092
      %1125 = vmatprep.subr.mxu0 0.0
      %1126 = vmatpush1.msra.mxu0 0.0
      %1127 = vmatprep.subr.mxu0 0.0
      %1128 = vmatpush1.msra.mxu0 0.0
      %1129 = vmatprep.subr.mxu0 0.0
      %1130 = vmatpush1.msra.mxu0 0.0
      %1131 = vmatprep.subr.mxu0 0.0
      %1132 = vmatpush1.msra.mxu0 0.0
      %1133 = vmatprep.subr.mxu0 0.0
      %1134 = vmatpush1.msra.mxu0 0.0
      %1135 = vmatprep.subr.mxu0 0.0
      %1136 = vmatpush1.msra.mxu0 0.0
      %1137 = vmatprep.subr.mxu0 0.0
      %1138 = vmatpush1.msra.mxu0 0.0
      %1139 = vmatprep.subr.mxu0 0.0
      %1140 = vmatpush1.msra.mxu0 0.0
      %1141 = vmatprep.subr.mxu0 0.0
      %1142 = vmatpush1.msra.mxu0 0.0
      %1143 = vmatprep.subr.mxu0 0.0
      %1144 = vmatpush1.msra.mxu0 0.0
      %1145 = vmatprep.subr.mxu0 0.0
      %1146 = vmatpush1.msra.mxu0 0.0
      %1147 = vmatprep.subr.mxu0 0.0
      %1148 = vmatpush1.msra.mxu0 0.0
      %1149 = vmatprep.subr.mxu0 0.0
      %1150 = vmatpush1.msra.mxu0 0.0
      %1151 = vmatprep.subr.mxu0 0.0
      %1152 = vmatpush1.msra.mxu0 0.0
      %1153 = vmatprep.subr.mxu0 0.0
      %1154 = vmatpush1.msra.mxu0 0.0
      %1155 = vmatprep.subr.mxu0 0.0
      %1156 = vmatpush1.msra.mxu0 0.0
      %1157 = vmatprep.mubr.f32.mxu0 0.0
      %1158 = vmatmul.mubr.f32.gmra.mrb[0].mxu0 %v1073
      %v1159 = vpop.f32.mrb[0].mxu0
      %v1160 = vadd.f32 0.0, %v1159
      %v1161 = vpop.f32.mrb[0].mxu0
      %1162 = vmatprep.mubr.f32.mxu0 0.0
      %1163 = vmatmul.mubr.f32.gmra.mrb[0].mxu0 %v1074
      %v1164 = vpop.f32.mrb[0].mxu0
      %v1165 = vadd.f32 0.0, %v1164
      %v1166 = vpop.f32.mrb[0].mxu0
      %1167 = vmatprep.mubr.f32.mxu0 0.0
      %1168 = vmatmul.mubr.f32.gmra.mrb[0].mxu0 %v1075
      %v1169 = vpop.f32.mrb[0].mxu0
      %v1170 = vadd.f32 0.0, %v1169
      %v1171 = vpop.f32.mrb[0].mxu0
      %1172 = vmatprep.mubr.f32.mxu0 0.0
      %1173 = vmatmul.mubr.f32.gmra.mrb[0].mxu0 %v1076
      %v1174 = vpop.f32.mrb[0].mxu0
      %v1175 = vadd.f32 0.0, %v1174
      %v1176 = vpop.f32.mrb[0].mxu0
      %1177 = vdwg.mxu0
      %v1178 = vld [vmem:[%s6] sm:$0x1]
      %v1180 = vlaneseq
      %v1181 = vshrl.u32 %v1180, 7
      %v1182 = vsub.s32 0, %v1181
      %v1183 = vrot.slane %v1178, %v1182
      %v1185 = vmul.f32 %v1160, %v1183
      %v1186 = vmul.f32 %v1165, %v1183
      %v1187 = vmul.f32 %v1170, %v1183
      %v1188 = vmul.f32 %v1175, %v1183
      %v1189 = vadd.f32 %v1069, %v1185
      %v1190 = vadd.f32 %v1070, %v1186
      %v1191 = vadd.f32 %v1071, %v1187
      %v1192 = vadd.f32 %v1072, %v1188
      %v1193 = vld [vmem:[%s7] sm:$0x1]
      %v1195 = vlaneseq
      %v1196 = vshrl.u32 %v1195, 7
      %v1197 = vsub.s32 0, %v1196
      %v1198 = vrot.slane %v1193, %v1197
      %v1200 = vadd.f32 %v1189, %v1198
      %v1201 = vadd.f32 %v1190, %v1198
      %v1202 = vadd.f32 %v1191, %v1198
      %v1203 = vadd.f32 %v1192, %v1198
      %v1204 = vmax.f32 %v1200, 0.0
      %v1205 = vmax.f32 %v1201, 0.0
      %v1206 = vmax.f32 %v1202, 0.0
      %v1207 = vmax.f32 %v1203, 0.0
      %1208 = vst [vmem:[%s363] sm:$0xff] %v1204
      %1209 = vst [vmem:[%s363 + $0x8] sm:$0xff] %v1205
      %1210 = vst [vmem:[%s363 + $0x10] sm:$0xff] %v1206
      %1211 = vst [vmem:[%s363 + $0x18] sm:$0xff] %v1207
      %s1212 = smul.u32 4, %s24
      %p1213 = scmp.lt.s32.totalorder %s23, 1
      %s1214 = scalar_select %p1213, %s23, 1
      %p1215 = scmp.lt.s32.totalorder %s1212, 7
      %s1216 = scalar_select %p1215, %s1212, 7
      %s1217 = smul.addr %s1214, 8
      %s1218 = sadd.s32 %s1216, %s1217
      %s1219 = smul.addr %s1218, 8
      %s1220 = scalar_lea.vmem %s8, %s1219
      // Predicated region
      $region53: #{basic_block_forward.3} parent=51 // pred_check
        %p1221 = pneg %p231
      $region54: #{basic_block_forward.3} parent=51 // pred_check_branch
        %1223 = sbr.rel (%p1221) target = $region56
      $region55: #{basic_block_forward.3} parent=51 // pred_region
        %s1224 = smul.u32 4, %s24
      $region56: #{basic_block_forward.3} parent=51 // pred_fallthru
        _
    $region52: #{basic_block_forward.3} parent=5 // pred_fallthru
      _
    %p1225 = scmp.le.s32.totalorder 2, %s14
    // Predicated region
    $region57: #{basic_block_forward.3} parent=5 // pred_check
      %p1226 = pneg %p1225
    $region58: #{basic_block_forward.3} parent=5 // pred_check_branch
      %1228 = sbr.rel (%p1226) target = $region60
    $region59: #{basic_block_forward.3} parent=5 // pred_region
      %s1229 = ssub.s32 %s14, 2
      // Predicated region
      $region61: #{basic_block_forward.3} parent=59 // pred_check
        %p1230 = pneg %p237
      $region62: #{basic_block_forward.3} parent=59 // pred_check_branch
        %1232 = sbr.rel (%p1230) target = $region64
      $region63: #{basic_block_forward.3} parent=59 // pred_region
        %s1233 = smul.u32 4, %s26
        %p1234 = scmp.lt.s32.totalorder %s25, 1
        %s1235 = scalar_select %p1234, %s25, 1
        %p1236 = scmp.lt.s32.totalorder %s1233, 7
        %s1237 = scalar_select %p1236, %s1233, 7
        %s1238 = smul.addr %s1235, 8
        %s1239 = sadd.s32 %s1237, %s1238
        %s1240 = smul.addr %s1239, 8
        %s1241 = scalar_lea.vmem %s8, %s1240
      $region64: #{basic_block_forward.3} parent=59 // pred_fallthru
        _
    $region60: #{basic_block_forward.3} parent=5 // pred_fallthru
      _
  $region6: #{basic_block_forward.3} parent=0 // loop_footer
    %s18 = sadd.s32 1, %s14
  $region7: #{basic_block_forward.3} parent=0 // loop_footer_branch
    %13 = sbr.rel target = $region3
  $region8: #{basic_block_forward.3} parent=0 // loop_exit
    _

</llo_original>
